<compile_context>
chip_gen: v6e
topology: v6e:2x2x1
jax: 0.10.0
libtpu: 0.0.40
codegen_flags: <defaults>
</compile_context>

<pallas_src>
import functools

import jax
import jax.numpy as jnp
from jax.experimental import pallas as pl
from jax.experimental.pallas import tpu as pltpu

EPS = 1e-5
NEG_SLOPE = 0.1


def _leaky(h):
    return jnp.where(h > 0, h, NEG_SLOPE * h)


def _round_up(v, m):
    return (v + m - 1) // m * m


def _vmem_limit_bytes():
    # Generation-aware scoped-VMEM request: ~3/4 of physical VMEM
    # (~96 MiB on v5e/v6e's 128 MiB, ~48 MiB on v7x's 64 MiB).
    try:
        phys = int(pltpu.get_tpu_info().vmem_capacity_bytes)
    except Exception:
        phys = 64 * 1024 * 1024  # conservative fallback (v7x physical size)
    return phys * 3 // 4


def _row_tile(total_rows, bytes_per_row, *, target_bytes=2 * 1024 * 1024,
              min_steps=8, align=16):
    """Largest `align`-aligned divisor of total_rows that (a) keeps one block near
    `target_bytes` and (b) leaves >= min_steps grid steps when possible.  Falls
    back to the full extent (always a legal block) for tiny shapes."""
    cap = max(align, min(target_bytes // max(1, bytes_per_row),
                         max(align, total_rows // min_steps)))
    cap = min(cap, total_rows)
    best = None
    t = align
    while t <= cap:
        if total_rows % t == 0:
            best = t
        t += align
    return best if best is not None else total_rows


def _h_tile(H, bytes_per_row, *, target_bytes=4 * 1024 * 1024, min_steps=4):
    """Divisor of H sizing kernel B's output slab (leading dim -> no alignment)."""
    cap = max(1, min(target_bytes // max(1, bytes_per_row),
                     H // min_steps if H >= min_steps else H))
    cap = min(cap, H)
    for t in range(cap, 0, -1):
        if H % t == 0:
            return t
    return 1


# --------------------------------------------------------------------------- #
# Kernel A: 1x1 conv (high -> low) + per-tile partial BN1 statistics.
# Grid over tiles of the fully flattened pixel axis (M = N*H*W).
# --------------------------------------------------------------------------- #
def _conv1x1_stats_kernel(x_ref, w1_ref, h1_ref, s1_ref):
    xw = x_ref[...].astype(w1_ref.dtype)                         # MXU operands
    h = jnp.dot(xw, w1_ref[...], preferred_element_type=jnp.float32)  # (TM, Clo)
    h1_ref[...] = h.astype(h1_ref.dtype)
    # Single-pass statistics in f32: per-channel [sum, sum_sq] for this tile.
    s1_ref[...] = jnp.concatenate(
        [jnp.sum(h, axis=0, keepdims=True),
         jnp.sum(h * h, axis=0, keepdims=True)], axis=0)[None]


# --------------------------------------------------------------------------- #
# Kernel B: folded BN1 + LeakyReLU, 3x3 conv (low -> high) as ONE im2col matmul
# per TH-row slab, plus per-slab partial BN2 statistics.  Grid = (N, H // TH).
# --------------------------------------------------------------------------- #
def _conv3x3_stats_kernel(h1_ref, sc1_ref, sh1_ref, w2_ref, h2_ref, s2_ref,
                          hpad_ref):
    _, H, W, clo = h1_ref.shape
    th = h2_ref.shape[1]
    chi = w2_ref.shape[1]
    ht = pl.program_id(1)

    # Build the padded activation for this image ONCE (first slab of the image).
    # Safe under megacore: the ht axis is "arbitrary" (never sharded, in-order per
    # core), so whichever core owns image b runs its ht==0 step first and
    # (re)initializes the scratch, halo zeros included.
    @pl.when(ht == 0)
    def _():
        a = _leaky(h1_ref[0].astype(jnp.float32) * sc1_ref[...] + sh1_ref[...])
        hpad_ref[...] = jnp.zeros(hpad_ref.shape, hpad_ref.dtype)
        hpad_ref[1:H + 1, 1:W + 1, :] = a

    # TH output rows need padded rows [ht*TH, ht*TH + TH + 2).
    row0 = pl.multiple_of(ht * th, th)

    # im2col for this slab only: (TH*W, 9*Clo) patches -> single MXU matmul.
    # TODO(synk): for Clo >= 128 switch to 9 accumulated matmuls to avoid the 9x
    # patch copy (K = Clo already saturates the MXU contraction there).
    cols = []
    for ky in range(3):
        for kx in range(3):
            part = hpad_ref[pl.ds(row0 + ky, th), kx:kx + W, :]   # (TH, W, Clo)
            cols.append(part.reshape(th * W, clo))
    patches = jnp.concatenate(cols, axis=-1).astype(w2_ref.dtype)  # (TH*W, 9*Clo)
    h2 = jnp.dot(patches, w2_ref[...], preferred_element_type=jnp.float32)

    h2_ref[...] = h2.reshape(1, th, W, chi).astype(h2_ref.dtype)
    s2_ref[...] = jnp.concatenate(
        [jnp.sum(h2, axis=0, keepdims=True),
         jnp.sum(h2 * h2, axis=0, keepdims=True)], axis=0)[None, None]


# --------------------------------------------------------------------------- #
# Kernel C: folded BN2 + LeakyReLU + residual add.  Pure elementwise on
# lane-dense (TR, W*Chi) blocks (scale/shift pre-tiled along W in the wrapper).
# --------------------------------------------------------------------------- #
def _bn_residual_kernel(h2_ref, x_ref, sc2_ref, sh2_ref, o_ref):
    y = _leaky(h2_ref[...].astype(jnp.float32) * sc2_ref[...] + sh2_ref[...])
    o_ref[...] = (y + x_ref[...].astype(jnp.float32)).astype(o_ref.dtype)


def _fold_bn(partial_stats, gamma, beta, count):
    """partial_stats: (..., 2, C) per-tile [sum, sum_sq] -> folded BN scale/shift.
    Single-pass variance in f32 (see header note on cancellation)."""
    c = partial_stats.shape[-1]
    s = jnp.sum(partial_stats.reshape(-1, 2, c), axis=0)          # (2, C)
    mu = s[0] / count
    var = s[1] / count - mu * mu                                  # biased var
    scale = gamma.astype(jnp.float32) * jax.lax.rsqrt(var + EPS)
    shift = beta.astype(jnp.float32) - mu * scale
    return scale, shift


@functools.partial(jax.jit, static_argnames=("compute_dtype",))
def resblock_forward(x_nchw, w1_oihw, g1, b1, w2_oihw, g2, b2,
                     compute_dtype=jnp.bfloat16):
    """x_nchw: (N, Chi, H, W); conv weights in PyTorch OIHW layout."""
    N, Chi, H, W = x_nchw.shape
    Clo = w1_oihw.shape[0]
    M = N * H * W                       # pixels (BN statistics count)
    R = N * H                           # rows for the lane-dense elementwise pass
    csize = jnp.dtype(compute_dtype).itemsize
    vmem_limit = _vmem_limit_bytes()

    # Layout glue required by the NCHW interface (keep the net NHWC to drop it).
    x_nhwc = jnp.transpose(x_nchw, (0, 2, 3, 1))                  # (N,H,W,Chi)
    x_pix = x_nhwc.reshape(M, Chi)                                # 1x1-conv view
    x_ld = x_nhwc.reshape(R, W * Chi)                             # lane-dense view
    w1_k = jnp.transpose(w1_oihw[:, :, 0, 0], (1, 0)).astype(compute_dtype)
    w2_k = jnp.transpose(w2_oihw, (2, 3, 1, 0)).reshape(9 * Clo, Chi)
    w2_k = w2_k.astype(compute_dtype)
    cnt = jnp.float32(M)

    # --- A: 1x1 conv + partial BN1 stats (grid over pixel-row tiles) ---------
    TM = _row_tile(M, _round_up(Chi, 128) * 4 + _round_up(Clo, 128) * csize)
    GA = M // TM
    h1, s1 = pl.pallas_call(
        _conv1x1_stats_kernel,
        grid=(GA,),
        in_specs=[pl.BlockSpec((TM, Chi), lambda i: (i, 0)),
                  pl.BlockSpec((Chi, Clo), lambda i: (0, 0))],
        out_specs=(pl.BlockSpec((TM, Clo), lambda i: (i, 0)),
                   pl.BlockSpec((1, 2, Clo), lambda i: (i, 0, 0))),
        out_shape=(jax.ShapeDtypeStruct((M, Clo), compute_dtype),
                   jax.ShapeDtypeStruct((GA, 2, Clo), jnp.float32)),
        compiler_params=pltpu.CompilerParams(
            dimension_semantics=("parallel",), vmem_limit_bytes=vmem_limit),
    )(x_pix, w1_k)

    scale1, shift1 = _fold_bn(s1, g1, b1, cnt)

    # --- B: BN1 + LReLU + 3x3 conv per H-slab + partial BN2 stats ------------
    TH = _h_tile(H, W * (9 * _round_up(Clo, 128) * 4
                         + 2 * _round_up(Chi, 128) * csize))
    HT = H // TH
    h2, s2 = pl.pallas_call(
        _conv3x3_stats_kernel,
        grid=(N, HT),
        in_specs=[pl.BlockSpec((1, H, W, Clo), lambda b, t: (b, 0, 0, 0)),
                  pl.BlockSpec((1, Clo), lambda b, t: (0, 0)),
                  pl.BlockSpec((1, Clo), lambda b, t: (0, 0)),
                  pl.BlockSpec((9 * Clo, Chi), lambda b, t: (0, 0))],
        out_specs=(pl.BlockSpec((1, TH, W, Chi), lambda b, t: (b, t, 0, 0)),
                   pl.BlockSpec((1, 1, 2, Chi), lambda b, t: (b, t, 0, 0))),
        out_shape=(jax.ShapeDtypeStruct((N, H, W, Chi), compute_dtype),
                   jax.ShapeDtypeStruct((N, HT, 2, Chi), jnp.float32)),
        scratch_shapes=[pltpu.VMEM((H + 2, W + 2, Clo), jnp.float32)],
        compiler_params=pltpu.CompilerParams(
            dimension_semantics=("parallel", "arbitrary"),
            vmem_limit_bytes=vmem_limit),
    )(h1.reshape(N, H, W, Clo), scale1.reshape(1, Clo),
      shift1.reshape(1, Clo), w2_k)

    scale2, shift2 = _fold_bn(s2, g2, b2, cnt)
    # Pre-tile BN2 scale/shift along W so kernel C stays pure elementwise on
    # lane-dense (TR, W*Chi) blocks (unmasked 128-lane stores).
    sc2 = jnp.tile(scale2, W).reshape(1, W * Chi)
    sh2 = jnp.tile(shift2, W).reshape(1, W * Chi)

    # --- C: BN2 + LReLU + residual add (lane-dense, HBM-bound) ---------------
    TR = _row_tile(R, W * Chi * (csize + 2 * x_nchw.dtype.itemsize))
    GC = R // TR
    out2 = pl.pallas_call(
        _bn_residual_kernel,
        grid=(GC,),
        in_specs=[pl.BlockSpec((TR, W * Chi), lambda i: (i, 0)),
                  pl.BlockSpec((TR, W * Chi), lambda i: (i, 0)),
                  pl.BlockSpec((1, W * Chi), lambda i: (0, 0)),
                  pl.BlockSpec((1, W * Chi), lambda i: (0, 0))],
        out_specs=pl.BlockSpec((TR, W * Chi), lambda i: (i, 0)),
        out_shape=jax.ShapeDtypeStruct((R, W * Chi), x_nchw.dtype),
        compiler_params=pltpu.CompilerParams(
            dimension_semantics=("parallel",), vmem_limit_bytes=vmem_limit),
    )(h2.reshape(R, W * Chi), x_ld, sc2, sh2)

    return jnp.transpose(out2.reshape(N, H, W, Chi), (0, 3, 1, 2))  # back to NCHW


def resblock_reference(x, w1_oihw, g1, b1, w2_oihw, g2, b2):
    """Pure-JAX reference using lax.conv (NCHW / OIHW), training-mode BN."""
    def bn_lrelu(h, g, b):
        mu = jnp.mean(h, axis=(0, 2, 3), keepdims=True)
        var = jnp.mean((h - mu) ** 2, axis=(0, 2, 3), keepdims=True)
        h = (h - mu) * jax.lax.rsqrt(var + EPS)
        h = h * g.reshape(1, -1, 1, 1) + b.reshape(1, -1, 1, 1)
        return jnp.where(h > 0, h, NEG_SLOPE * h)

    h = jax.lax.conv_general_dilated(x, w1_oihw, (1, 1), 'VALID')
    h = bn_lrelu(h, g1, b1)
    h = jax.lax.conv_general_dilated(h, w2_oihw, (1, 1), ((1, 1), (1, 1)))
    h = bn_lrelu(h, g2, b2)
    return h + x


if __name__ == "__main__":
    # Small shapes: batch=2, high=8, low=4, spatial=16x16.
    N, HIGH, LOW, H, W = 2, 8, 4, 16, 16

    key = jax.random.PRNGKey(0)
    kx_, kw1, kw2, kg1, kb1, kg2, kb2 = jax.random.split(key, 7)

    x = jax.random.normal(kx_, (N, HIGH, H, W), jnp.float32)
    # Conv weights, PyTorch OIHW layout, deterministic init.
    w1 = jax.random.normal(kw1, (LOW, HIGH, 1, 1), jnp.float32) * 0.1
    w2 = jax.random.normal(kw2, (HIGH, LOW, 3, 3), jnp.float32) * 0.1
    # BatchNorm affine params (random to exercise the affine path).
    g1 = 1.0 + 0.1 * jax.random.normal(kg1, (LOW,), jnp.float32)
    b1 = 0.1 * jax.random.normal(kb1, (LOW,), jnp.float32)
    g2 = 1.0 + 0.1 * jax.random.normal(kg2, (HIGH,), jnp.float32)
    b2 = 0.1 * jax.random.normal(kb2, (HIGH,), jnp.float32)

    ref = resblock_reference(x, w1, g1, b1, w2, g2, b2)

    # f32 path: same math as the PyTorch module -> tight tolerance.
    out32 = resblock_forward(x, w1, g1, b1, w2, g2, b2,
                             compute_dtype=jnp.float32)
    out32 = jax.block_until_ready(out32)
    assert out32.shape == x.shape and out32.dtype == x.dtype
    assert jnp.allclose(out32, ref, atol=2e-3, rtol=2e-3), (
        f"f32 path max abs err {jnp.max(jnp.abs(out32 - ref))}")

    # bf16 fast path (MXU operands + bf16 h1/h2 intermediates, f32 stats):
    # two conv layers each followed by a BN rescale by 1/std, so the expected
    # error is a few x 1e-2 absolute -> check against a correspondingly looser
    # bound (structure/semantics are already validated by the f32 path above).
    out16 = resblock_forward(x, w1, g1, b1, w2, g2, b2,
                             compute_dtype=jnp.bfloat16)
    out16 = jax.block_until_ready(out16)
    assert out16.shape == x.shape and out16.dtype == x.dtype
    err = jnp.abs(out16 - ref)
    max_err = float(jnp.max(err))
    rms_err = float(jnp.sqrt(jnp.mean(err * err)))
    assert max_err < 1.5e-1 and rms_err < 4e-2, (
        f"bf16 path max abs err {max_err}, rms err {rms_err}")

    print("KERNEL_OK")
</pallas_src>

<mosaic_0001>
module attributes {stable_mosaic.version = 11 : i64} {
  func.func @_conv1x1_stats_kernel(%arg0: i32, %arg1: memref<64x8xf32, #tpu.memory_space<vmem>>, %arg2: memref<8x4xf32, #tpu.memory_space<vmem>>, %arg3: memref<64x4xf32, #tpu.memory_space<vmem>>, %arg4: memref<1x2x4xf32, #tpu.memory_space<vmem>>) attributes {dimension_semantics = [#tpu.dimension_semantics<parallel>], iteration_bounds = array<i64: 8>, scalar_prefetch = 0 : i64, scratch_operands = 0 : i64, tpu.core_type = #tpu.core_type<tc>, window_params = [{transform_indices = @transform_0, window_bounds = array<i64: 64, 8>}, {pipeline_mode = #tpu.pipeline_mode<synchronous>, transform_indices = @transform_1, window_bounds = array<i64: 8, 4>}, {transform_indices = @transform_2, window_bounds = array<i64: 64, 4>}, {transform_indices = @transform_3, window_bounds = array<i64: 1, 2, 4>}]} {
    %c0 = arith.constant 0 : index
    %c0_0 = arith.constant 0 : index
    %0 = vector.load %arg1[%c0, %c0_0] : memref<64x8xf32, #tpu.memory_space<vmem>>, vector<64x8xf32>
    %c0_1 = arith.constant 0 : index
    %c0_2 = arith.constant 0 : index
    %1 = vector.load %arg2[%c0_1, %c0_2] : memref<8x4xf32, #tpu.memory_space<vmem>>, vector<8x4xf32>
    %cst = arith.constant dense<0.000000e+00> : vector<64x4xf32>
    %2 = tpu.matmul %0, %1, %cst {dimension_numbers = #tpu.dot_dimension_numbers<[1], [0], [0], [1], [0, 0, 1, 1], [], []>} : vector<64x8xf32>, vector<8x4xf32>, vector<64x4xf32> -> vector<64x4xf32>
    %c0_3 = arith.constant 0 : index
    %c0_4 = arith.constant 0 : index
    %3 = vector.load %arg3[%c0_3, %c0_4] : memref<64x4xf32, #tpu.memory_space<vmem>>, vector<64x4xf32>
    tpu.vector_store %arg3[%c0_3, %c0_4], %2 {strides = array<i32>} : memref<64x4xf32, #tpu.memory_space<vmem>>, vector<64x4xf32>,
    %cst_5 = arith.constant dense<0.000000e+00> : vector<4xf32>
    %4 = vector.multi_reduction <add>, %2, %cst_5 [0] : vector<64x4xf32> to vector<4xf32>
    %5 = vector.shape_cast %4 : vector<4xf32> to vector<1x4xf32>
    %6 = arith.mulf %2, %2 : vector<64x4xf32>
    %cst_6 = arith.constant dense<0.000000e+00> : vector<4xf32>
    %7 = vector.multi_reduction <add>, %6, %cst_6 [0] : vector<64x4xf32> to vector<4xf32>
    %8 = vector.shape_cast %7 : vector<4xf32> to vector<1x4xf32>
    %9 = tpu.concatenate %5, %8 in 0 : vector<1x4xf32>, vector<1x4xf32> -> vector<2x4xf32>
    %10 = vector.shape_cast %9 : vector<2x4xf32> to vector<1x2x4xf32>
    %c0_7 = arith.constant 0 : index
    %c0_8 = arith.constant 0 : index
    %c0_9 = arith.constant 0 : index
    %11 = vector.load %arg4[%c0_7, %c0_8, %c0_9] : memref<1x2x4xf32, #tpu.memory_space<vmem>>, vector<1x2x4xf32>
    tpu.vector_store %arg4[%c0_7, %c0_8, %c0_9], %10 {strides = array<i32>} : memref<1x2x4xf32, #tpu.memory_space<vmem>>, vector<1x2x4xf32>,
    return
  }
  func.func @transform_0(%arg0: i32) -> (i32, i32) {
    %c0_i32 = arith.constant 0 : i32
    %c0_i32_0 = arith.constant 0 : i32
    return %arg0, %c0_i32 : i32, i32
  }
  func.func @transform_1(%arg0: i32) -> (i32, i32) {
    %c0_i32 = arith.constant 0 : i32
    %c0_i32_0 = arith.constant 0 : i32
    %c0_i32_1 = arith.constant 0 : i32
    return %c0_i32, %c0_i32_0 : i32, i32
  }
  func.func @transform_2(%arg0: i32) -> (i32, i32) {
    %c0_i32 = arith.constant 0 : i32
    %c0_i32_0 = arith.constant 0 : i32
    return %arg0, %c0_i32 : i32, i32
  }
  func.func @transform_3(%arg0: i32) -> (i32, i32, i32) {
    %c0_i32 = arith.constant 0 : i32
    %c0_i32_0 = arith.constant 0 : i32
    %c0_i32_1 = arith.constant 0 : i32
    return %arg0, %c0_i32, %c0_i32_0 : i32, i32, i32
  }
}

module attributes {stable_mosaic.version = 11 : i64} {
  func.func @_conv3x3_stats_kernel(%arg0: i32, %arg1: i32, %arg2: memref<1x16x16x4xf32, #tpu.memory_space<vmem>>, %arg3: memref<1x4xf32, #tpu.memory_space<vmem>>, %arg4: memref<1x4xf32, #tpu.memory_space<vmem>>, %arg5: memref<36x8xf32, #tpu.memory_space<vmem>>, %arg6: memref<1x4x16x8xf32, #tpu.memory_space<vmem>>, %arg7: memref<1x1x2x8xf32, #tpu.memory_space<vmem>>, %arg8: memref<18x18x4xf32, #tpu.memory_space<vmem>>) attributes {dimension_semantics = [#tpu.dimension_semantics<parallel>, #tpu.dimension_semantics<arbitrary>], iteration_bounds = array<i64: 2, 4>, scalar_prefetch = 0 : i64, scratch_operands = 1 : i64, tpu.core_type = #tpu.core_type<tc>, window_params = [{transform_indices = @transform_0, window_bounds = array<i64: 1, 16, 16, 4>}, {pipeline_mode = #tpu.pipeline_mode<synchronous>, transform_indices = @transform_1, window_bounds = array<i64: 1, 4>}, {pipeline_mode = #tpu.pipeline_mode<synchronous>, transform_indices = @transform_2, window_bounds = array<i64: 1, 4>}, {pipeline_mode = #tpu.pipeline_mode<synchronous>, transform_indices = @transform_3, window_bounds = array<i64: 36, 8>}, {transform_indices = @transform_4, window_bounds = array<i64: 1, 4, 16, 8>}, {transform_indices = @transform_5, window_bounds = array<i64: 1, 1, 2, 8>}]} {
    %c0_i32 = arith.constant 0 : i32
    %0 = arith.cmpi eq, %arg1, %c0_i32 : i32
    %1 = arith.extui %0 : i1 to i32
    %c0_i32_0 = arith.constant 0 : i32
    %2 = arith.cmpi ne, %1, %c0_i32_0 : i32
    scf.if %2 {
      %c0_35 = arith.constant 0 : index
      %c0_36 = arith.constant 0 : index
      %c0_37 = arith.constant 0 : index
      %c0_38 = arith.constant 0 : index
      %54 = vector.load %arg2[%c0_35, %c0_36, %c0_37, %c0_38] : memref<1x16x16x4xf32, #tpu.memory_space<vmem>>, vector<1x16x16x4xf32>
      %55 = vector.shape_cast %54 : vector<1x16x16x4xf32> to vector<16x16x4xf32>
      %c0_39 = arith.constant 0 : index
      %c0_40 = arith.constant 0 : index
      %56 = vector.load %arg3[%c0_39, %c0_40] : memref<1x4xf32, #tpu.memory_space<vmem>>, vector<1x4xf32>
      %57 = vector.shape_cast %56 : vector<1x4xf32> to vector<1x1x4xf32>
      %58 = vector.broadcast %57 : vector<1x1x4xf32> to vector<16x16x4xf32>
      %59 = arith.mulf %55, %58 : vector<16x16x4xf32>
      %c0_41 = arith.constant 0 : index
      %c0_42 = arith.constant 0 : index
      %60 = vector.load %arg4[%c0_41, %c0_42] : memref<1x4xf32, #tpu.memory_space<vmem>>, vector<1x4xf32>
      %61 = vector.shape_cast %60 : vector<1x4xf32> to vector<1x1x4xf32>
      %62 = vector.broadcast %61 : vector<1x1x4xf32> to vector<16x16x4xf32>
      %63 = arith.addf %59, %62 : vector<16x16x4xf32>
      %cst_43 = arith.constant 0.000000e+00 : f32
      %64 = vector.broadcast %cst_43 : f32 to vector<16x16x4xf32>
      %65 = arith.cmpf ogt, %63, %64 : vector<16x16x4xf32>
      %cst_44 = arith.constant 1.000000e-01 : f32
      %66 = vector.broadcast %cst_44 : f32 to vector<16x16x4xf32>
      %67 = arith.mulf %66, %63 : vector<16x16x4xf32>
      %68 = arith.select %65, %63, %67 : vector<16x16x4xi1>, vector<16x16x4xf32>
      %cst_45 = arith.constant 0.000000e+00 : f32
      %69 = vector.broadcast %cst_45 : f32 to vector<18x18x4xf32>
      %c0_46 = arith.constant 0 : index
      %c0_47 = arith.constant 0 : index
      %c0_48 = arith.constant 0 : index
      %70 = vector.load %arg8[%c0_46, %c0_47, %c0_48] : memref<18x18x4xf32, #tpu.memory_space<vmem>>, vector<18x18x4xf32>
      tpu.vector_store %arg8[%c0_46, %c0_47, %c0_48], %69 {strides = array<i32>} : memref<18x18x4xf32, #tpu.memory_space<vmem>>, vector<18x18x4xf32>,
      %c1_49 = arith.constant 1 : index
      %c1_50 = arith.constant 1 : index
      %c0_51 = arith.constant 0 : index
      %71 = vector.load %arg8[%c1_49, %c1_50, %c0_51] : memref<18x18x4xf32, #tpu.memory_space<vmem>>, vector<16x16x4xf32>
      tpu.vector_store %arg8[%c1_49, %c1_50, %c0_51], %68 {strides = array<i32>} : memref<18x18x4xf32, #tpu.memory_space<vmem>>, vector<16x16x4xf32>,
    } else {
    }
    %c4_i32 = arith.constant 4 : i32
    %3 = arith.muli %arg1, %c4_i32 : i32
    %4 = tpu.assume_multiple %3, 4 : i32
    %c0_i32_1 = arith.constant 0 : i32
    %5 = arith.addi %4, %c0_i32_1 : i32
    %6 = arith.index_cast %5 : i32 to index
    %c0 = arith.constant 0 : index
    %c0_2 = arith.constant 0 : index
    %7 = vector.load %arg8[%6, %c0, %c0_2] : memref<18x18x4xf32, #tpu.memory_space<vmem>>, vector<4x16x4xf32>
    %8 = vector.shape_cast %7 : vector<4x16x4xf32> to vector<64x4xf32>
    %c0_i32_3 = arith.constant 0 : i32
    %9 = arith.addi %4, %c0_i32_3 : i32
    %10 = arith.index_cast %9 : i32 to index
    %c1 = arith.constant 1 : index
    %c0_4 = arith.constant 0 : index
    %11 = vector.load %arg8[%10, %c1, %c0_4] : memref<18x18x4xf32, #tpu.memory_space<vmem>>, vector<4x16x4xf32>
    %12 = vector.shape_cast %11 : vector<4x16x4xf32> to vector<64x4xf32>
    %c0_i32_5 = arith.constant 0 : i32
    %13 = arith.addi %4, %c0_i32_5 : i32
    %14 = arith.index_cast %13 : i32 to index
    %c2 = arith.constant 2 : index
    %c0_6 = arith.constant 0 : index
    %15 = vector.load %arg8[%14, %c2, %c0_6] : memref<18x18x4xf32, #tpu.memory_space<vmem>>, vector<4x16x4xf32>
    %16 = vector.shape_cast %15 : vector<4x16x4xf32> to vector<64x4xf32>
    %c1_i32 = arith.constant 1 : i32
    %17 = arith.addi %4, %c1_i32 : i32
    %18 = arith.index_cast %17 : i32 to index
    %c0_7 = arith.constant 0 : index
    %c0_8 = arith.constant 0 : index
    %19 = vector.load %arg8[%18, %c0_7, %c0_8] : memref<18x18x4xf32, #tpu.memory_space<vmem>>, vector<4x16x4xf32>
    %20 = vector.shape_cast %19 : vector<4x16x4xf32> to vector<64x4xf32>
    %c1_i32_9 = arith.constant 1 : i32
    %21 = arith.addi %4, %c1_i32_9 : i32
    %22 = arith.index_cast %21 : i32 to index
    %c1_10 = arith.constant 1 : index
    %c0_11 = arith.constant 0 : index
    %23 = vector.load %arg8[%22, %c1_10, %c0_11] : memref<18x18x4xf32, #tpu.memory_space<vmem>>, vector<4x16x4xf32>
    %24 = vector.shape_cast %23 : vector<4x16x4xf32> to vector<64x4xf32>
    %c1_i32_12 = arith.constant 1 : i32
    %25 = arith.addi %4, %c1_i32_12 : i32
    %26 = arith.index_cast %25 : i32 to index
    %c2_13 = arith.constant 2 : index
    %c0_14 = arith.constant 0 : index
    %27 = vector.load %arg8[%26, %c2_13, %c0_14] : memref<18x18x4xf32, #tpu.memory_space<vmem>>, vector<4x16x4xf32>
    %28 = vector.shape_cast %27 : vector<4x16x4xf32> to vector<64x4xf32>
    %c2_i32 = arith.constant 2 : i32
    %29 = arith.addi %4, %c2_i32 : i32
    %30 = arith.index_cast %29 : i32 to index
    %c0_15 = arith.constant 0 : index
    %c0_16 = arith.constant 0 : index
    %31 = vector.load %arg8[%30, %c0_15, %c0_16] : memref<18x18x4xf32, #tpu.memory_space<vmem>>, vector<4x16x4xf32>
    %32 = vector.shape_cast %31 : vector<4x16x4xf32> to vector<64x4xf32>
    %c2_i32_17 = arith.constant 2 : i32
    %33 = arith.addi %4, %c2_i32_17 : i32
    %34 = arith.index_cast %33 : i32 to index
    %c1_18 = arith.constant 1 : index
    %c0_19 = arith.constant 0 : index
    %35 = vector.load %arg8[%34, %c1_18, %c0_19] : memref<18x18x4xf32, #tpu.memory_space<vmem>>, vector<4x16x4xf32>
    %36 = vector.shape_cast %35 : vector<4x16x4xf32> to vector<64x4xf32>
    %c2_i32_20 = arith.constant 2 : i32
    %37 = arith.addi %4, %c2_i32_20 : i32
    %38 = arith.index_cast %37 : i32 to index
    %c2_21 = arith.constant 2 : index
    %c0_22 = arith.constant 0 : index
    %39 = vector.load %arg8[%38, %c2_21, %c0_22] : memref<18x18x4xf32, #tpu.memory_space<vmem>>, vector<4x16x4xf32>
    %40 = vector.shape_cast %39 : vector<4x16x4xf32> to vector<64x4xf32>
    %41 = tpu.concatenate %8, %12, %16, %20, %24, %28, %32, %36, %40 in 1 : vector<64x4xf32>, vector<64x4xf32>, vector<64x4xf32>, vector<64x4xf32>, vector<64x4xf32>, vector<64x4xf32>, vector<64x4xf32>, vector<64x4xf32>, vector<64x4xf32> -> vector<64x36xf32>
    %c0_23 = arith.constant 0 : index
    %c0_24 = arith.constant 0 : index
    %42 = vector.load %arg5[%c0_23, %c0_24] : memref<36x8xf32, #tpu.memory_space<vmem>>, vector<36x8xf32>
    %cst = arith.constant dense<0.000000e+00> : vector<64x8xf32>
    %43 = tpu.matmul %41, %42, %cst {dimension_numbers = #tpu.dot_dimension_numbers<[1], [0], [0], [1], [0, 0, 1, 1], [], []>} : vector<64x36xf32>, vector<36x8xf32>, vector<64x8xf32> -> vector<64x8xf32>
    %44 = vector.shape_cast %43 : vector<64x8xf32> to vector<1x4x16x8xf32>
    %c0_25 = arith.constant 0 : index
    %c0_26 = arith.constant 0 : index
    %c0_27 = arith.constant 0 : index
    %c0_28 = arith.constant 0 : index
    %45 = vector.load %arg6[%c0_25, %c0_26, %c0_27, %c0_28] : memref<1x4x16x8xf32, #tpu.memory_space<vmem>>, vector<1x4x16x8xf32>
    tpu.vector_store %arg6[%c0_25, %c0_26, %c0_27, %c0_28], %44 {strides = array<i32>} : memref<1x4x16x8xf32, #tpu.memory_space<vmem>>, vector<1x4x16x8xf32>,
    %cst_29 = arith.constant dense<0.000000e+00> : vector<8xf32>
    %46 = vector.multi_reduction <add>, %43, %cst_29 [0] : vector<64x8xf32> to vector<8xf32>
    %47 = vector.shape_cast %46 : vector<8xf32> to vector<1x8xf32>
    %48 = arith.mulf %43, %43 : vector<64x8xf32>
    %cst_30 = arith.constant dense<0.000000e+00> : vector<8xf32>
    %49 = vector.multi_reduction <add>, %48, %cst_30 [0] : vector<64x8xf32> to vector<8xf32>
    %50 = vector.shape_cast %49 : vector<8xf32> to vector<1x8xf32>
    %51 = tpu.concatenate %47, %50 in 0 : vector<1x8xf32>, vector<1x8xf32> -> vector<2x8xf32>
    %52 = vector.shape_cast %51 : vector<2x8xf32> to vector<1x1x2x8xf32>
    %c0_31 = arith.constant 0 : index
    %c0_32 = arith.constant 0 : index
    %c0_33 = arith.constant 0 : index
    %c0_34 = arith.constant 0 : index
    %53 = vector.load %arg7[%c0_31, %c0_32, %c0_33, %c0_34] : memref<1x1x2x8xf32, #tpu.memory_space<vmem>>, vector<1x1x2x8xf32>
    tpu.vector_store %arg7[%c0_31, %c0_32, %c0_33, %c0_34], %52 {strides = array<i32>} : memref<1x1x2x8xf32, #tpu.memory_space<vmem>>, vector<1x1x2x8xf32>,
    return
  }
  func.func @transform_0(%arg0: i32, %arg1: i32) -> (i32, i32, i32, i32) {
    %c0_i32 = arith.constant 0 : i32
    %c0_i32_0 = arith.constant 0 : i32
    %c0_i32_1 = arith.constant 0 : i32
    %c0_i32_2 = arith.constant 0 : i32
    return %arg0, %c0_i32, %c0_i32_0, %c0_i32_1 : i32, i32, i32, i32
  }
  func.func @transform_1(%arg0: i32, %arg1: i32) -> (i32, i32) {
    %c0_i32 = arith.constant 0 : i32
    %c0_i32_0 = arith.constant 0 : i32
    %c0_i32_1 = arith.constant 0 : i32
    return %c0_i32, %c0_i32_0 : i32, i32
  }
  func.func @transform_2(%arg0: i32, %arg1: i32) -> (i32, i32) {
    %c0_i32 = arith.constant 0 : i32
    %c0_i32_0 = arith.constant 0 : i32
    %c0_i32_1 = arith.constant 0 : i32
    return %c0_i32, %c0_i32_0 : i32, i32
  }
  func.func @transform_3(%arg0: i32, %arg1: i32) -> (i32, i32) {
    %c0_i32 = arith.constant 0 : i32
    %c0_i32_0 = arith.constant 0 : i32
    %c0_i32_1 = arith.constant 0 : i32
    return %c0_i32, %c0_i32_0 : i32, i32
  }
  func.func @transform_4(%arg0: i32, %arg1: i32) -> (i32, i32, i32, i32) {
    %c0_i32 = arith.constant 0 : i32
    %c0_i32_0 = arith.constant 0 : i32
    %c0_i32_1 = arith.constant 0 : i32
    return %arg0, %arg1, %c0_i32, %c0_i32_0 : i32, i32, i32, i32
  }
  func.func @transform_5(%arg0: i32, %arg1: i32) -> (i32, i32, i32, i32) {
    %c0_i32 = arith.constant 0 : i32
    %c0_i32_0 = arith.constant 0 : i32
    %c0_i32_1 = arith.constant 0 : i32
    return %arg0, %arg1, %c0_i32, %c0_i32_0 : i32, i32, i32, i32
  }
}

module attributes {stable_mosaic.version = 11 : i64} {
  func.func @_bn_residual_kernel(%arg0: i32, %arg1: memref<16x128xf32, #tpu.memory_space<vmem>>, %arg2: memref<16x128xf32, #tpu.memory_space<vmem>>, %arg3: memref<1x128xf32, #tpu.memory_space<vmem>>, %arg4: memref<1x128xf32, #tpu.memory_space<vmem>>, %arg5: memref<16x128xf32, #tpu.memory_space<vmem>>) attributes {dimension_semantics = [#tpu.dimension_semantics<parallel>], iteration_bounds = array<i64: 2>, scalar_prefetch = 0 : i64, scratch_operands = 0 : i64, tpu.core_type = #tpu.core_type<tc>, window_params = [{transform_indices = @transform_0, window_bounds = array<i64: 16, 128>}, {transform_indices = @transform_1, window_bounds = array<i64: 16, 128>}, {pipeline_mode = #tpu.pipeline_mode<synchronous>, transform_indices = @transform_2, window_bounds = array<i64: 1, 128>}, {pipeline_mode = #tpu.pipeline_mode<synchronous>, transform_indices = @transform_3, window_bounds = array<i64: 1, 128>}, {transform_indices = @transform_4, window_bounds = array<i64: 16, 128>}]} {
    %c0 = arith.constant 0 : index
    %c0_0 = arith.constant 0 : index
    %0 = vector.load %arg1[%c0, %c0_0] : memref<16x128xf32, #tpu.memory_space<vmem>>, vector<16x128xf32>
    %c0_1 = arith.constant 0 : index
    %c0_2 = arith.constant 0 : index
    %1 = vector.load %arg3[%c0_1, %c0_2] : memref<1x128xf32, #tpu.memory_space<vmem>>, vector<1x128xf32>
    %2 = vector.broadcast %1 : vector<1x128xf32> to vector<16x128xf32>
    %3 = arith.mulf %0, %2 : vector<16x128xf32>
    %c0_3 = arith.constant 0 : index
    %c0_4 = arith.constant 0 : index
    %4 = vector.load %arg4[%c0_3, %c0_4] : memref<1x128xf32, #tpu.memory_space<vmem>>, vector<1x128xf32>
    %5 = vector.broadcast %4 : vector<1x128xf32> to vector<16x128xf32>
    %6 = arith.addf %3, %5 : vector<16x128xf32>
    %cst = arith.constant 0.000000e+00 : f32
    %7 = vector.broadcast %cst : f32 to vector<16x128xf32>
    %8 = arith.cmpf ogt, %6, %7 : vector<16x128xf32>
    %cst_5 = arith.constant 1.000000e-01 : f32
    %9 = vector.broadcast %cst_5 : f32 to vector<16x128xf32>
    %10 = arith.mulf %9, %6 : vector<16x128xf32>
    %11 = arith.select %8, %6, %10 : vector<16x128xi1>, vector<16x128xf32>
    %c0_6 = arith.constant 0 : index
    %c0_7 = arith.constant 0 : index
    %12 = vector.load %arg2[%c0_6, %c0_7] : memref<16x128xf32, #tpu.memory_space<vmem>>, vector<16x128xf32>
    %13 = arith.addf %11, %12 : vector<16x128xf32>
    %c0_8 = arith.constant 0 : index
    %c0_9 = arith.constant 0 : index
    %14 = vector.load %arg5[%c0_8, %c0_9] : memref<16x128xf32, #tpu.memory_space<vmem>>, vector<16x128xf32>
    tpu.vector_store %arg5[%c0_8, %c0_9], %13 {strides = array<i32>} : memref<16x128xf32, #tpu.memory_space<vmem>>, vector<16x128xf32>,
    return
  }
  func.func @transform_0(%arg0: i32) -> (i32, i32) {
    %c0_i32 = arith.constant 0 : i32
    %c0_i32_0 = arith.constant 0 : i32
    return %arg0, %c0_i32 : i32, i32
  }
  func.func @transform_1(%arg0: i32) -> (i32, i32) {
    %c0_i32 = arith.constant 0 : i32
    %c0_i32_0 = arith.constant 0 : i32
    return %arg0, %c0_i32 : i32, i32
  }
  func.func @transform_2(%arg0: i32) -> (i32, i32) {
    %c0_i32 = arith.constant 0 : i32
    %c0_i32_0 = arith.constant 0 : i32
    %c0_i32_1 = arith.constant 0 : i32
    return %c0_i32, %c0_i32_0 : i32, i32
  }
  func.func @transform_3(%arg0: i32) -> (i32, i32) {
    %c0_i32 = arith.constant 0 : i32
    %c0_i32_0 = arith.constant 0 : i32
    %c0_i32_1 = arith.constant 0 : i32
    return %c0_i32, %c0_i32_0 : i32, i32
  }
  func.func @transform_4(%arg0: i32) -> (i32, i32) {
    %c0_i32 = arith.constant 0 : i32
    %c0_i32_0 = arith.constant 0 : i32
    return %arg0, %c0_i32 : i32, i32
  }
}

</mosaic_0001>

<llo_original>
// kernel: tile.13
$region0: #{tile.13}
  #allocation0 [shape = 's32[1]{0}', space=sflag, size = 0x4, scoped, tag = 'scoped memory for tile.13']
  %s0 = inlined_call_operand.vmem [shape: f32[8], index: 0, kind: input, shape index: {}]
  %s1 = inlined_call_operand.vmem [shape: f32[16,8], index: 1, kind: output, shape index: {}]
  // Predicated region
  $region2: #{tile.13} parent=0 // pred_check
    _
  $region3: #{tile.13} parent=0 // pred_check_branch
    %3 = sbr.rel (0) target = $region5
  $region4: #{tile.13} parent=0 // pred_region
    _
  $region5: #{tile.13} parent=0 // pred_fallthru
    _
  %v4 = vld [vmem:[%s0] ss:$0 sm:$0xff]
  %5 = vst [vmem:[%s1] sm:$0xff] %v4
  %s6 = scalar_lea.vmem %s1, 8
  %7 = vst [vmem:[%s6] sm:$0xff] %v4

// kernel: tile.14
$region0: #{tile.14}
  %s0 = inlined_call_operand.vmem [shape: f32[16,8], index: 0, kind: input, shape index: {}]
  %s1 = inlined_call_operand.vmem [shape: f32[1,128], index: 1, kind: output, shape index: {}]
  $region1: #{tile.14} parent=0
    #allocation0 [shape = 'u8[4096]{0}', space=vmem, size = 0x1000, scoped, tag = 'scoped mem for output reshape']
    %v2 = vld [vmem:[%s0] sm:$0x1]
    %vm3 = vcmask 64512
    %4 = vst.msk [vmem:[#allocation0] sm:$0x1] %vm3, %v2
    %s5 = scalar_lea.vmem %s0, 15
    %v6 = vld [vmem:[%s5] sm:$0x1]
    %7 = vrot.lane.b32.xlu0 %v6, 120
    %v8 = vpop.permute.xlu0 %7
    %vm9 = vcmask 1048512
    %10 = vst.msk [vmem:[#allocation0] sm:$0x1] %vm9, %v8
    %s11 = scalar_lea.vmem %s0, 14
    %v12 = vld [vmem:[%s11] sm:$0x1]
    %13 = vrot.lane.b32.xlu0 %v12, 112
    %v14 = vpop.permute.xlu0 %13
    %vm15 = vcmask 982912
    %16 = vst.msk [vmem:[#allocation0] sm:$0x1] %vm15, %v14
    %s17 = scalar_lea.vmem %s0, 13
    %v18 = vld [vmem:[%s17] sm:$0x1]
    %19 = vrot.lane.b32.xlu0 %v18, 104
    %v20 = vpop.permute.xlu0 %19
    %vm21 = vcmask 917312
    %22 = vst.msk [vmem:[#allocation0] sm:$0x1] %vm21, %v20
    %s23 = scalar_lea.vmem %s0, 12
    %v24 = vld [vmem:[%s23] sm:$0x1]
    %25 = vrot.lane.b32.xlu0 %v24, 96
    %v26 = vpop.permute.xlu0 %25
    %vm27 = vcmask 851712
    %28 = vst.msk [vmem:[#allocation0] sm:$0x1] %vm27, %v26
    %s29 = scalar_lea.vmem %s0, 11
    %v30 = vld [vmem:[%s29] sm:$0x1]
    %31 = vrot.lane.b32.xlu0 %v30, 88
    %v32 = vpop.permute.xlu0 %31
    %vm33 = vcmask 786112
    %34 = vst.msk [vmem:[#allocation0] sm:$0x1] %vm33, %v32
    %s35 = scalar_lea.vmem %s0, 10
    %v36 = vld [vmem:[%s35] sm:$0x1]
    %37 = vrot.lane.b32.xlu0 %v36, 80
    %v38 = vpop.permute.xlu0 %37
    %vm39 = vcmask 720512
    %40 = vst.msk [vmem:[#allocation0] sm:$0x1] %vm39, %v38
    %s41 = scalar_lea.vmem %s0, 9
    %v42 = vld [vmem:[%s41] sm:$0x1]
    %43 = vrot.lane.b32.xlu0 %v42, 72
    %v44 = vpop.permute.xlu0 %43
    %vm45 = vcmask 654912
    %46 = vst.msk [vmem:[#allocation0] sm:$0x1] %vm45, %v44
    %s47 = scalar_lea.vmem %s0, 8
    %v48 = vld [vmem:[%s47] sm:$0x1]
    %49 = vrot.lane.b32.xlu0 %v48, 64
    %v50 = vpop.permute.xlu0 %49
    %vm51 = vcmask 589312
    %52 = vst.msk [vmem:[#allocation0] sm:$0x1] %vm51, %v50
    %s53 = scalar_lea.vmem %s0, 7
    %v54 = vld [vmem:[%s53] sm:$0x1]
    %55 = vrot.lane.b32.xlu0 %v54, 56
    %v56 = vpop.permute.xlu0 %55
    %vm57 = vcmask 523712
    %58 = vst.msk [vmem:[#allocation0] sm:$0x1] %vm57, %v56
    %s59 = scalar_lea.vmem %s0, 6
    %v60 = vld [vmem:[%s59] sm:$0x1]
    %61 = vrot.lane.b32.xlu0 %v60, 48
    %v62 = vpop.permute.xlu0 %61
    %vm63 = vcmask 458112
    %64 = vst.msk [vmem:[#allocation0] sm:$0x1] %vm63, %v62
    %s65 = scalar_lea.vmem %s0, 5
    %v66 = vld [vmem:[%s65] sm:$0x1]
    %67 = vrot.lane.b32.xlu0 %v66, 40
    %v68 = vpop.permute.xlu0 %67
    %vm69 = vcmask 392512
    %70 = vst.msk [vmem:[#allocation0] sm:$0x1] %vm69, %v68
    %s71 = scalar_lea.vmem %s0, 4
    %v72 = vld [vmem:[%s71] sm:$0x1]
    %73 = vrot.lane.b32.xlu0 %v72, 32
    %v74 = vpop.permute.xlu0 %73
    %vm75 = vcmask 326912
    %76 = vst.msk [vmem:[#allocation0] sm:$0x1] %vm75, %v74
    %s77 = scalar_lea.vmem %s0, 3
    %v78 = vld [vmem:[%s77] sm:$0x1]
    %79 = vrot.lane.b32.xlu0 %v78, 24
    %v80 = vpop.permute.xlu0 %79
    %vm81 = vcmask 261312
    %82 = vst.msk [vmem:[#allocation0] sm:$0x1] %vm81, %v80
    %s83 = scalar_lea.vmem %s0, 2
    %v84 = vld [vmem:[%s83] sm:$0x1]
    %85 = vrot.lane.b32.xlu0 %v84, 16
    %v86 = vpop.permute.xlu0 %85
    %vm87 = vcmask 195712
    %88 = vst.msk [vmem:[#allocation0] sm:$0x1] %vm87, %v86
    %s89 = scalar_lea.vmem %s0, 1
    %v90 = vld [vmem:[%s89] sm:$0x1]
    %91 = vrot.lane.b32.xlu0 %v90, 8
    %v92 = vpop.permute.xlu0 %91
    %vm93 = vcmask 130112
    %94 = vst.msk [vmem:[#allocation0] sm:$0x1] %vm93, %v92
    %s96 = sshll.u32 1, 1
    %s97 = ssub.s32 %s96, 1
    %v99 = vld [vmem:[#allocation0] sm:%s97]
    %s100 = sshll.u32 1, 1
    %s101 = ssub.s32 %s100, 1
    %102 = vst [vmem:[%s1] sm:%s101] %v99

// kernel: resblock_forward.3
$region0: #{resblock_forward.3}
  #allocation0 [shape = 'u32[]', space=smem, size = 0x4, offset = 0x4, fixed_abs, tag = 'smem constant byte address 0x4 - core index']
  #allocation1 [shape = 'u32[144,128]{1,0:T(1,128)}', space=vmem, size = 0x12000, scoped, tag = 'internal scratch']
  %s0 = inlined_call_operand.vmem [shape: f32[512,8], index: 0, kind: input, shape index: {}]
  %s1 = inlined_call_operand.vmem [shape: f32[8,4], index: 1, kind: input, shape index: {}]
  %s2 = inlined_call_operand.vmem [shape: f32[512,4], index: 2, kind: output, shape index: {0}]
  %s3 = inlined_call_operand.vmem [shape: f32[8,2,4], index: 3, kind: output, shape index: {1}]
  %4 = xla_tuple %s2, %s3
  %s5 = sld [smem:[#allocation0]]
  $region49: #{resblock_forward.3} parent=0
    _
  %s7 = ssub.s32 1, %s5
  %s8 = scalar_select 0, %s7, %s5
  loop: start=0, step=1, limit=10
  $region2: #{resblock_forward.3} parent=0 // loop_pre_header
    _
  $region3: #{resblock_forward.3} parent=0 // loop_header
    %s10 = sphi 0, %s14
    %p11 = scmp.ge.s32.totalorder %s10, 10
    %s20 = sphi 0, %s22
    %s23 = sphi 0, %s20
    %s24 = sphi 0, %s23
    %s40 = sphi 0, %s24
    %s44 = sphi 0, %s44
    %s46 = sphi 0, %s44
    %s47 = sphi 0, %s46
    %s61 = sphi 0, %s47
    %s67 = sphi 0, %s69
    %s70 = sphi 0, %s67
    %s71 = sphi 0, %s70
    %s87 = sphi 0, %s71
    %s93 = sphi 0, %s95
    %s96 = sphi 0, %s93
    %s97 = sphi 0, %s96
    %s113 = sphi 0, %s97
  $region4: #{resblock_forward.3} parent=0 // loop_header_branch
    %13 = sbr.rel (%p11) target = $region8
  $region5: #{resblock_forward.3} parent=0 // loop_body
    %s15 = ssub.s32 %s10, 1
    %s16 = ssub.s32 %s10, 2
    %s17 = sadd.s32 %s10, 1
    %s18 = ssub.s32 %s10, %s17
    %p19 = scmp.eq.s32.totalorder %s18, 0
    %s21 = sadd.s32 %s20, 1
    %s22 = scalar_select %p19, %s20, %s21
    %p25 = pneg %p19
    %p26 = scmp.eq.s32.totalorder %s10, 7
    %p27 = por %p25, %p26
    %p28 = scmp.ne.s32.totalorder %s20, %s23
    %p29 = scmp.eq.s32.totalorder %s10, 0
    %p30 = por %p28, %p29
    %p31 = scmp.ne.s32.totalorder %s20, %s23
    %p32 = scmp.eq.s32.totalorder %s15, 7
    %p33 = por %p31, %p32
    %p34 = scmp.ne.s32.totalorder %s23, %s24
    %p35 = scmp.eq.s32.totalorder %s15, 0
    %p36 = por %p34, %p35
    %p37 = scmp.ne.s32.totalorder %s23, %s24
    %p38 = scmp.eq.s32.totalorder %s16, 7
    %p39 = por %p37, %p38
    %p41 = scmp.ne.s32.totalorder %s24, %s40
    %p42 = scmp.eq.s32.totalorder %s16, 0
    %p43 = por %p41, %p42
    %s45 = sadd.s32 %s44, 1
    %p48 = scmp.eq.s32.totalorder %s10, 7
    %p49 = scmp.ne.s32.totalorder %s44, %s46
    %p50 = scmp.eq.s32.totalorder %s10, 0
    %p51 = por %p49, %p50
    %p52 = scmp.ne.s32.totalorder %s44, %s46
    %p53 = scmp.eq.s32.totalorder %s15, 7
    %p54 = por %p52, %p53
    %p55 = scmp.ne.s32.totalorder %s46, %s47
    %p56 = scmp.eq.s32.totalorder %s15, 0
    %p57 = por %p55, %p56
    %p58 = scmp.ne.s32.totalorder %s46, %s47
    %p59 = scmp.eq.s32.totalorder %s16, 7
    %p60 = por %p58, %p59
    %p62 = scmp.ne.s32.totalorder %s47, %s61
    %p63 = scmp.eq.s32.totalorder %s16, 0
    %p64 = por %p62, %p63
    %s65 = ssub.s32 %s10, %s17
    %p66 = scmp.eq.s32.totalorder %s65, 0
    %s68 = sadd.s32 %s67, 1
    %s69 = scalar_select %p66, %s67, %s68
    %p72 = pneg %p66
    %p73 = scmp.eq.s32.totalorder %s10, 7
    %p74 = por %p72, %p73
    %p75 = scmp.ne.s32.totalorder %s67, %s70
    %p76 = scmp.eq.s32.totalorder %s10, 0
    %p77 = por %p75, %p76
    %p78 = scmp.ne.s32.totalorder %s67, %s70
    %p79 = scmp.eq.s32.totalorder %s15, 7
    %p80 = por %p78, %p79
    %p81 = scmp.ne.s32.totalorder %s70, %s71
    %p82 = scmp.eq.s32.totalorder %s15, 0
    %p83 = por %p81, %p82
    %p84 = scmp.ne.s32.totalorder %s70, %s71
    %p85 = scmp.eq.s32.totalorder %s16, 7
    %p86 = por %p84, %p85
    %p88 = scmp.ne.s32.totalorder %s71, %s87
    %p89 = scmp.eq.s32.totalorder %s16, 0
    %p90 = por %p88, %p89
    %s91 = ssub.s32 %s10, %s17
    %p92 = scmp.eq.s32.totalorder %s91, 0
    %s94 = sadd.s32 %s93, 1
    %s95 = scalar_select %p92, %s93, %s94
    %p98 = pneg %p92
    %p99 = scmp.eq.s32.totalorder %s10, 7
    %p100 = por %p98, %p99
    %p101 = scmp.ne.s32.totalorder %s93, %s96
    %p102 = scmp.eq.s32.totalorder %s10, 0
    %p103 = por %p101, %p102
    %p104 = scmp.ne.s32.totalorder %s93, %s96
    %p105 = scmp.eq.s32.totalorder %s15, 7
    %p106 = por %p104, %p105
    %p107 = scmp.ne.s32.totalorder %s96, %s97
    %p108 = scmp.eq.s32.totalorder %s15, 0
    %p109 = por %p107, %p108
    %p110 = scmp.ne.s32.totalorder %s96, %s97
    %p111 = scmp.eq.s32.totalorder %s16, 7
    %p112 = por %p110, %p111
    %p114 = scmp.ne.s32.totalorder %s97, %s113
    %p115 = scmp.eq.s32.totalorder %s16, 0
    %p116 = por %p114, %p115
    %p117 = scmp.le.s32.totalorder 1, %s10
    %p118 = scmp.lt.s32.totalorder %s10, 9
    %p119 = pnand %p117, %p118
    %p120 = pneg %p119
    // Predicated region
    $region9: #{resblock_forward.3} parent=5 // pred_check
      _
    $region10: #{resblock_forward.3} parent=5 // pred_check_branch
      %122 = sbr.rel (%p119) target = $region12
    $region11: #{resblock_forward.3} parent=5 // pred_region
      %s123 = ssub.s32 %s10, 1
      // Predicated region
      $region13: #{resblock_forward.3} parent=11 // pred_check
        %p124 = pneg %p57
      $region14: #{resblock_forward.3} parent=11 // pred_check_branch
        %126 = sbr.rel (%p124) target = $region16
      $region15: #{resblock_forward.3} parent=11 // pred_region
        _
      $region16: #{resblock_forward.3} parent=11 // pred_fallthru
        _
    $region12: #{resblock_forward.3} parent=5 // pred_fallthru
      _
    %p127 = scmp.lt.s32.totalorder %s10, 8
    // Predicated region
    $region17: #{resblock_forward.3} parent=5 // pred_check
      %p128 = pneg %p127
    $region18: #{resblock_forward.3} parent=5 // pred_check_branch
      %130 = sbr.rel (%p128) target = $region20
    $region19: #{resblock_forward.3} parent=5 // pred_region
      // Predicated region
      $region21: #{resblock_forward.3} parent=19 // pred_check
        %p131 = pneg %p30
      $region22: #{resblock_forward.3} parent=19 // pred_check_branch
        %133 = sbr.rel (%p131) target = $region24
      $region23: #{resblock_forward.3} parent=19 // pred_region
        %s134 = smul.u32 8, %s10
        %p135 = scmp.lt.s32.totalorder %s134, 63
        %s136 = scalar_select %p135, %s134, 63
        %s137 = smul.addr %s136, 8
        %s138 = scalar_lea.vmem %s0, %s137
        %s139 = smul.u32 8, %s10
      $region24: #{resblock_forward.3} parent=19 // pred_fallthru
        _
    $region20: #{resblock_forward.3} parent=5 // pred_fallthru
      _
    %p140 = scmp.le.s32.totalorder 1, %s10
    %p141 = scmp.lt.s32.totalorder %s10, 9
    %p142 = pnand %p140, %p141
    %p143 = pneg %p142
    // Predicated region
    $region25: #{resblock_forward.3} parent=5 // pred_check
      _
    $region26: #{resblock_forward.3} parent=5 // pred_check_branch
      %145 = sbr.rel (%p142) target = $region28
    $region27: #{resblock_forward.3} parent=5 // pred_region
      %s146 = ssub.s32 %s10, 1
      %s147 = smul.u32 8, %s15
      %p148 = scmp.lt.s32.totalorder %s147, 63
      %s149 = scalar_select %p148, %s147, 63
      %s150 = smul.addr %s149, 8
      %s151 = scalar_lea.vmem %s0, %s150
      %p152 = pneg %p36
      %p153 = pneg %p33
      %p154 = pneg %p57
      %p155 = pneg %p54
      %p156 = pneg %p83
      %p157 = pneg %p80
      %s158 = smul.u32 8, %s15
      %p159 = scmp.lt.s32.totalorder %s158, 63
      %s160 = scalar_select %p159, %s158, 63
      %s161 = smul.addr %s160, 8
      %s162 = scalar_lea.vmem %s2, %s161
      %p163 = pneg %p109
      %p164 = pneg %p106
      %p165 = scmp.lt.s32.totalorder %s15, 7
      %s166 = scalar_select %p165, %s15, 7
      %s167 = smul.addr %s166, 2
      %s168 = scalar_lea.vmem %s3, %s167
      %s169 = smul.u32 8, %s15
      %p170 = scmp.lt.s32.totalorder %s169, 63
      %s171 = scalar_select %p170, %s169, 63
      %s172 = smul.addr %s171, 8
      %s173 = scalar_lea.vmem %s0, %s172
      %s174 = smul.u32 8, %s15
      %s175 = smul.u32 8, %s15
      %p176 = scmp.lt.s32.totalorder %s175, 63
      %s177 = scalar_select %p176, %s175, 63
      %s178 = smul.addr %s177, 8
      %s179 = scalar_lea.vmem %s2, %s178
      %s180 = smul.u32 8, %s15
      %p181 = scmp.lt.s32.totalorder %s15, 7
      %s182 = scalar_select %p181, %s15, 7
      %s183 = smul.addr %s182, 2
      %s184 = scalar_lea.vmem %s3, %s183
      %v185 = vld [vmem:[%s173] sm:$0xff]
      %v186 = vld [vmem:[%s173 + $0x8] sm:$0xff]
      %v187 = vld [vmem:[%s173 + $0x10] sm:$0xff]
      %v188 = vld [vmem:[%s173 + $0x18] sm:$0xff]
      %v189 = vld [vmem:[%s173 + $0x20] sm:$0xff]
      %v190 = vld [vmem:[%s173 + $0x28] sm:$0xff]
      %v191 = vld [vmem:[%s173 + $0x30] sm:$0xff]
      %v192 = vld [vmem:[%s173 + $0x38] sm:$0xff]
      %v193 = vld [vmem:[%s1] sm:$0xff]
      %vm194 = vcmask 64512
      %v196 = vsel %vm194, %v185, 0
      %v199 = vsel %vm194, %v186, 0
      %v202 = vsel %vm194, %v187, 0
      %v205 = vsel %vm194, %v188, 0
      %v208 = vsel %vm194, %v189, 0
      %v211 = vsel %vm194, %v190, 0
      %v214 = vsel %vm194, %v191, 0
      %v217 = vsel %vm194, %v192, 0
      %219 = vmatprep.subr.mxu0 0.0
      %220 = vmatpush1.msra.mxu0 0.0
      %221 = vmatprep.subr.mxu0 0.0
      %222 = vmatpush1.msra.mxu0 0.0
      %223 = vmatprep.subr.mxu0 0.0
      %224 = vmatpush1.msra.mxu0 0.0
      %225 = vmatprep.subr.mxu0 0.0
      %226 = vmatpush1.msra.mxu0 0.0
      %227 = vmatprep.subr.mxu0 0.0
      %228 = vmatpush1.msra.mxu0 0.0
      %229 = vmatprep.subr.mxu0 0.0
      %230 = vmatpush1.msra.mxu0 0.0
      %231 = vmatprep.subr.mxu0 0.0
      %232 = vmatpush1.msra.mxu0 0.0
      %233 = vmatprep.subr.mxu0 0.0
      %234 = vmatpush1.msra.mxu0 0.0
      %235 = vmatprep.subr.mxu0 0.0
      %236 = vmatpush1.msra.mxu0 0.0
      %237 = vmatprep.subr.mxu0 0.0
      %238 = vmatpush1.msra.mxu0 0.0
      %239 = vmatprep.subr.mxu0 0.0
      %240 = vmatpush1.msra.mxu0 0.0
      %241 = vmatprep.subr.mxu0 0.0
      %242 = vmatpush1.msra.mxu0 0.0
      %243 = vmatprep.subr.mxu0 0.0
      %244 = vmatpush1.msra.mxu0 0.0
      %245 = vmatprep.subr.mxu0 0.0
      %246 = vmatpush1.msra.mxu0 0.0
      %247 = vmatprep.subr.mxu0 0.0
      %248 = vmatpush1.msra.mxu0 0.0
      %249 = vmatprep.subr.mxu0 0.0
      %250 = vmatpush1.msra.mxu0 %v193
      %251 = vmatprep.subr.mxu0 0.0
      %252 = vmatpush2.msra.mxu0 0.0
      %253 = vmatprep.subr.mxu0 0.0
      %254 = vmatpush2.msra.mxu0 0.0
      %255 = vmatprep.subr.mxu0 0.0
      %256 = vmatpush2.msra.mxu0 0.0
      %257 = vmatprep.subr.mxu0 0.0
      %258 = vmatpush2.msra.mxu0 0.0
      %259 = vmatprep.subr.mxu0 0.0
      %260 = vmatpush2.msra.mxu0 0.0
      %261 = vmatprep.subr.mxu0 0.0
      %262 = vmatpush2.msra.mxu0 0.0
      %263 = vmatprep.subr.mxu0 0.0
      %264 = vmatpush2.msra.mxu0 0.0
      %265 = vmatprep.subr.mxu0 0.0
      %266 = vmatpush2.msra.mxu0 0.0
      %267 = vmatprep.subr.mxu0 0.0
      %268 = vmatpush2.msra.mxu0 0.0
      %269 = vmatprep.subr.mxu0 0.0
      %270 = vmatpush2.msra.mxu0 0.0
      %271 = vmatprep.subr.mxu0 0.0
      %272 = vmatpush2.msra.mxu0 0.0
      %273 = vmatprep.subr.mxu0 0.0
      %274 = vmatpush2.msra.mxu0 0.0
      %275 = vmatprep.subr.mxu0 0.0
      %276 = vmatpush2.msra.mxu0 0.0
      %277 = vmatprep.subr.mxu0 0.0
      %278 = vmatpush2.msra.mxu0 0.0
      %279 = vmatprep.subr.mxu0 0.0
      %280 = vmatpush2.msra.mxu0 0.0
      %281 = vmatprep.subr.mxu0 0.0
      %282 = vmatpush2.msra.mxu0 0.0
      %283 = vmatprep.mubr.f32.mxu0 0.0
      %284 = vmatmul.mubr.f32.gmra.mxu0 %v196
      %v285 = vpop.f32.mrf.mxu0
      %v286 = vadd.f32 0.0, %v285
      %v287 = vpop.f32.mrf.mxu0
      %288 = vmatprep.mubr.f32.mxu0 0.0
      %289 = vmatmul.mubr.f32.gmra.mxu0 %v199
      %v290 = vpop.f32.mrf.mxu0
      %v291 = vadd.f32 0.0, %v290
      %v292 = vpop.f32.mrf.mxu0
      %293 = vmatprep.mubr.f32.mxu0 0.0
      %294 = vmatmul.mubr.f32.gmra.mxu0 %v202
      %v295 = vpop.f32.mrf.mxu0
      %v296 = vadd.f32 0.0, %v295
      %v297 = vpop.f32.mrf.mxu0
      %298 = vmatprep.mubr.f32.mxu0 0.0
      %299 = vmatmul.mubr.f32.gmra.mxu0 %v205
      %v300 = vpop.f32.mrf.mxu0
      %v301 = vadd.f32 0.0, %v300
      %v302 = vpop.f32.mrf.mxu0
      %303 = vmatprep.mubr.f32.mxu0 0.0
      %304 = vmatmul.mubr.f32.gmra.mxu0 %v208
      %v305 = vpop.f32.mrf.mxu0
      %v306 = vadd.f32 0.0, %v305
      %v307 = vpop.f32.mrf.mxu0
      %308 = vmatprep.mubr.f32.mxu0 0.0
      %309 = vmatmul.mubr.f32.gmra.mxu0 %v211
      %v310 = vpop.f32.mrf.mxu0
      %v311 = vadd.f32 0.0, %v310
      %v312 = vpop.f32.mrf.mxu0
      %313 = vmatprep.mubr.f32.mxu0 0.0
      %314 = vmatmul.mubr.f32.gmra.mxu0 %v214
      %v315 = vpop.f32.mrf.mxu0
      %v316 = vadd.f32 0.0, %v315
      %v317 = vpop.f32.mrf.mxu0
      %318 = vmatprep.mubr.f32.mxu0 0.0
      %319 = vmatmul.mubr.f32.gmra.mxu0 %v217
      %v320 = vpop.f32.mrf.mxu0
      %v321 = vadd.f32 0.0, %v320
      %v322 = vpop.f32.mrf.mxu0
      %323 = vdwg.mxu0
      %vm324 = vcmask 31744
      %325 = vst.msk [vmem:[%s179] sm:$0xff] %vm324, %v286
      %326 = vst.msk [vmem:[%s179 + $0x8] sm:$0xff] %vm324, %v291
      %327 = vst.msk [vmem:[%s179 + $0x10] sm:$0xff] %vm324, %v296
      %328 = vst.msk [vmem:[%s179 + $0x18] sm:$0xff] %vm324, %v301
      %329 = vst.msk [vmem:[%s179 + $0x20] sm:$0xff] %vm324, %v306
      %330 = vst.msk [vmem:[%s179 + $0x28] sm:$0xff] %vm324, %v311
      %331 = vst.msk [vmem:[%s179 + $0x30] sm:$0xff] %vm324, %v316
      %332 = vst.msk [vmem:[%s179 + $0x38] sm:$0xff] %vm324, %v321
      %v333 = vsel %vm324, %v286, 0.0
      %v334 = vsel %vm324, %v291, 0.0
      %v335 = vadd.f32 %v333, %v334
      %v336 = vsel %vm324, %v296, 0.0
      %v337 = vadd.f32 %v335, %v336
      %v338 = vsel %vm324, %v301, 0.0
      %v339 = vadd.f32 %v337, %v338
      %v340 = vsel %vm324, %v306, 0.0
      %v341 = vadd.f32 %v339, %v340
      %v342 = vsel %vm324, %v311, 0.0
      %v343 = vadd.f32 %v341, %v342
      %v344 = vsel %vm324, %v316, 0.0
      %v345 = vadd.f32 %v343, %v344
      %v346 = vsel %vm324, %v321, 0.0
      %v347 = vadd.f32 %v345, %v346
      %v348 = vrot.slane %v347, 4
      %v349 = vadd.f32 %v347, %v348
      %v350 = vrot.slane %v349, 2
      %v351 = vadd.f32 %v349, %v350
      %v352 = vrot.slane %v351, 1
      %v353 = vadd.f32 %v351, %v352
      %v354 = vmul.f32 %v286, %v286
      %v355 = vmul.f32 %v291, %v291
      %v356 = vmul.f32 %v296, %v296
      %v357 = vmul.f32 %v301, %v301
      %v358 = vmul.f32 %v306, %v306
      %v359 = vmul.f32 %v311, %v311
      %v360 = vmul.f32 %v316, %v316
      %v361 = vmul.f32 %v321, %v321
      %v362 = vsel %vm324, %v354, 0.0
      %v363 = vsel %vm324, %v355, 0.0
      %v364 = vadd.f32 %v362, %v363
      %v365 = vsel %vm324, %v356, 0.0
      %v366 = vadd.f32 %v364, %v365
      %v367 = vsel %vm324, %v357, 0.0
      %v368 = vadd.f32 %v366, %v367
      %v369 = vsel %vm324, %v358, 0.0
      %v370 = vadd.f32 %v368, %v369
      %v371 = vsel %vm324, %v359, 0.0
      %v372 = vadd.f32 %v370, %v371
      %v373 = vsel %vm324, %v360, 0.0
      %v374 = vadd.f32 %v372, %v373
      %v375 = vsel %vm324, %v361, 0.0
      %v376 = vadd.f32 %v374, %v375
      %v377 = vrot.slane %v376, 4
      %v378 = vadd.f32 %v376, %v377
      %v379 = vrot.slane %v378, 2
      %v380 = vadd.f32 %v378, %v379
      %v381 = vrot.slane %v380, 1
      %v382 = vadd.f32 %v380, %v381
      %vm383 = vcmask 1040384
      %v384 = vsel %vm383, %v353, %v382
      %vm385 = vcmask 25600
      %386 = vst.msk [vmem:[%s184] sm:$0x3] %vm385, %v384
      %s387 = smul.u32 8, %s15
      %p388 = scmp.lt.s32.totalorder %s387, 63
      %s389 = scalar_select %p388, %s387, 63
      %s390 = smul.addr %s389, 8
      %s391 = scalar_lea.vmem %s2, %s390
      %p392 = scmp.lt.s32.totalorder %s15, 7
      %s393 = scalar_select %p392, %s15, 7
      %s394 = smul.addr %s393, 2
      %s395 = scalar_lea.vmem %s3, %s394
      // Predicated region
      $region29: #{resblock_forward.3} parent=27 // pred_check
        %p396 = pneg %p80
      $region30: #{resblock_forward.3} parent=27 // pred_check_branch
        %398 = sbr.rel (%p396) target = $region32
      $region31: #{resblock_forward.3} parent=27 // pred_region
        %s399 = smul.u32 8, %s15
      $region32: #{resblock_forward.3} parent=27 // pred_fallthru
        _
      // Predicated region
      $region33: #{resblock_forward.3} parent=27 // pred_check
        %p400 = pneg %p106
      $region34: #{resblock_forward.3} parent=27 // pred_check_branch
        %402 = sbr.rel (%p400) target = $region36
      $region35: #{resblock_forward.3} parent=27 // pred_region
        _
      $region36: #{resblock_forward.3} parent=27 // pred_fallthru
        _
    $region28: #{resblock_forward.3} parent=5 // pred_fallthru
      _
    %p403 = scmp.le.s32.totalorder 2, %s10
    // Predicated region
    $region37: #{resblock_forward.3} parent=5 // pred_check
      %p404 = pneg %p403
    $region38: #{resblock_forward.3} parent=5 // pred_check_branch
      %406 = sbr.rel (%p404) target = $region40
    $region39: #{resblock_forward.3} parent=5 // pred_region
      %s407 = ssub.s32 %s10, 2
      // Predicated region
      $region41: #{resblock_forward.3} parent=39 // pred_check
        %p408 = pneg %p86
      $region42: #{resblock_forward.3} parent=39 // pred_check_branch
        %410 = sbr.rel (%p408) target = $region44
      $region43: #{resblock_forward.3} parent=39 // pred_region
        %s411 = smul.u32 8, %s16
        %p412 = scmp.lt.s32.totalorder %s411, 63
        %s413 = scalar_select %p412, %s411, 63
        %s414 = smul.addr %s413, 8
        %s415 = scalar_lea.vmem %s2, %s414
      $region44: #{resblock_forward.3} parent=39 // pred_fallthru
        _
      // Predicated region
      $region45: #{resblock_forward.3} parent=39 // pred_check
        %p416 = pneg %p112
      $region46: #{resblock_forward.3} parent=39 // pred_check_branch
        %418 = sbr.rel (%p416) target = $region48
      $region47: #{resblock_forward.3} parent=39 // pred_region
        %p419 = scmp.lt.s32.totalorder %s16, 7
        %s420 = scalar_select %p419, %s16, 7
        %s421 = smul.addr %s420, 2
        %s422 = scalar_lea.vmem %s3, %s421
      $region48: #{resblock_forward.3} parent=39 // pred_fallthru
        _
    $region40: #{resblock_forward.3} parent=5 // pred_fallthru
      _
  $region6: #{resblock_forward.3} parent=0 // loop_footer
    %s14 = sadd.s32 1, %s10
  $region7: #{resblock_forward.3} parent=0 // loop_footer_branch
    %9 = sbr.rel target = $region3
  $region8: #{resblock_forward.3} parent=0 // loop_exit
    _

// kernel: resblock_forward.4
$region0: #{resblock_forward.4}
  #allocation0 [shape = 'u32[]', space=smem, size = 0x4, offset = 0x4, fixed_abs, tag = 'smem constant byte address 0x4 - core index']
  #allocation1 [shape = 'u32[144,128]{1,0:T(1,128)}', space=vmem, size = 0x12000, scoped, tag = 'internal scratch']
  #allocation2 [shape = 'f32[18,18,4]{2,1,0:T(8,128)}', space=vmem, size = 0x36000, scoped, tag = 'scratch operand']
  %s0 = inlined_call_operand.vmem [shape: f32[2,16,16,4], index: 0, kind: input, shape index: {}]
  %s1 = inlined_call_operand.vmem [shape: f32[1,4], index: 1, kind: input, shape index: {}]
  %s2 = inlined_call_operand.vmem [shape: f32[1,4], index: 2, kind: input, shape index: {}]
  %s3 = inlined_call_operand.vmem [shape: f32[36,8], index: 3, kind: input, shape index: {}]
  %s4 = inlined_call_operand.vmem [shape: f32[2,16,16,8], index: 4, kind: output, shape index: {0}]
  %s5 = inlined_call_operand.vmem [shape: f32[2,4,2,8], index: 5, kind: output, shape index: {1}]
  %6 = xla_tuple %s4, %s5
  %s7 = sld [smem:[#allocation0]]
  $region61: #{resblock_forward.4} parent=0
    _
  %s9 = ssub.s32 1, %s7
  %s10 = scalar_select 0, %s9, %s7
  loop: start=0, step=1, limit=10
  $region2: #{resblock_forward.4} parent=0 // loop_pre_header
    _
  $region3: #{resblock_forward.4} parent=0 // loop_header
    %s12 = sphi 0, %s16
    %p13 = scmp.ge.s32.totalorder %s12, 10
    %s19 = sphi 0, %s31
    %s20 = sphi 0, %s27
    %s21 = sphi 0, %s19
    %s22 = sphi 0, %s20
    %s23 = sphi 0, %s21
    %s24 = sphi 0, %s22
    %s34 = sphi 0, %s36
    %s37 = sphi 0, %s34
    %s38 = sphi 0, %s37
    %s54 = sphi 0, %s38
    %s58 = sphi 0, %s58
    %s60 = sphi 0, %s58
    %s61 = sphi 0, %s60
    %s75 = sphi 0, %s61
    %s79 = sphi 0, %s79
    %s81 = sphi 0, %s79
    %s82 = sphi 0, %s81
    %s96 = sphi 0, %s82
    %s100 = sphi 0, %s100
    %s102 = sphi 0, %s100
    %s103 = sphi 0, %s102
    %s117 = sphi 0, %s103
    %s125 = sphi 0, %s127
    %s128 = sphi 0, %s125
    %s129 = sphi 0, %s128
    %s145 = sphi 0, %s129
    %s153 = sphi 0, %s155
    %s156 = sphi 0, %s153
    %s157 = sphi 0, %s156
    %s173 = sphi 0, %s157
  $region4: #{resblock_forward.4} parent=0 // loop_header_branch
    %15 = sbr.rel (%p13) target = $region8
  $region5: #{resblock_forward.4} parent=0 // loop_body
    %s17 = ssub.s32 %s12, 1
    %s18 = ssub.s32 %s12, 2
    %s25 = sadd.s32 1, %s20
    %p26 = scmp.ge.s32.totalorder %s25, 4
    %s27 = scalar_select %p26, 0, %s25
    %s28 = sadd.s32 1, %s19
    %s29 = scalar_select %p26, %s28, %s19
    %p30 = scmp.ge.s32.totalorder %s29, 2
    %s31 = scalar_select %p30, 0, %s29
    %s32 = ssub.s32 %s19, %s31
    %p33 = scmp.eq.s32.totalorder %s32, 0
    %s35 = sadd.s32 %s34, 1
    %s36 = scalar_select %p33, %s34, %s35
    %p39 = pneg %p33
    %p40 = scmp.eq.s32.totalorder %s12, 7
    %p41 = por %p39, %p40
    %p42 = scmp.ne.s32.totalorder %s34, %s37
    %p43 = scmp.eq.s32.totalorder %s12, 0
    %p44 = por %p42, %p43
    %p45 = scmp.ne.s32.totalorder %s34, %s37
    %p46 = scmp.eq.s32.totalorder %s17, 7
    %p47 = por %p45, %p46
    %p48 = scmp.ne.s32.totalorder %s37, %s38
    %p49 = scmp.eq.s32.totalorder %s17, 0
    %p50 = por %p48, %p49
    %p51 = scmp.ne.s32.totalorder %s37, %s38
    %p52 = scmp.eq.s32.totalorder %s18, 7
    %p53 = por %p51, %p52
    %p55 = scmp.ne.s32.totalorder %s38, %s54
    %p56 = scmp.eq.s32.totalorder %s18, 0
    %p57 = por %p55, %p56
    %s59 = sadd.s32 %s58, 1
    %p62 = scmp.eq.s32.totalorder %s12, 7
    %p63 = scmp.ne.s32.totalorder %s58, %s60
    %p64 = scmp.eq.s32.totalorder %s12, 0
    %p65 = por %p63, %p64
    %p66 = scmp.ne.s32.totalorder %s58, %s60
    %p67 = scmp.eq.s32.totalorder %s17, 7
    %p68 = por %p66, %p67
    %p69 = scmp.ne.s32.totalorder %s60, %s61
    %p70 = scmp.eq.s32.totalorder %s17, 0
    %p71 = por %p69, %p70
    %p72 = scmp.ne.s32.totalorder %s60, %s61
    %p73 = scmp.eq.s32.totalorder %s18, 7
    %p74 = por %p72, %p73
    %p76 = scmp.ne.s32.totalorder %s61, %s75
    %p77 = scmp.eq.s32.totalorder %s18, 0
    %p78 = por %p76, %p77
    %s80 = sadd.s32 %s79, 1
    %p83 = scmp.eq.s32.totalorder %s12, 7
    %p84 = scmp.ne.s32.totalorder %s79, %s81
    %p85 = scmp.eq.s32.totalorder %s12, 0
    %p86 = por %p84, %p85
    %p87 = scmp.ne.s32.totalorder %s79, %s81
    %p88 = scmp.eq.s32.totalorder %s17, 7
    %p89 = por %p87, %p88
    %p90 = scmp.ne.s32.totalorder %s81, %s82
    %p91 = scmp.eq.s32.totalorder %s17, 0
    %p92 = por %p90, %p91
    %p93 = scmp.ne.s32.totalorder %s81, %s82
    %p94 = scmp.eq.s32.totalorder %s18, 7
    %p95 = por %p93, %p94
    %p97 = scmp.ne.s32.totalorder %s82, %s96
    %p98 = scmp.eq.s32.totalorder %s18, 0
    %p99 = por %p97, %p98
    %s101 = sadd.s32 %s100, 1
    %p104 = scmp.eq.s32.totalorder %s12, 7
    %p105 = scmp.ne.s32.totalorder %s100, %s102
    %p106 = scmp.eq.s32.totalorder %s12, 0
    %p107 = por %p105, %p106
    %p108 = scmp.ne.s32.totalorder %s100, %s102
    %p109 = scmp.eq.s32.totalorder %s17, 7
    %p110 = por %p108, %p109
    %p111 = scmp.ne.s32.totalorder %s102, %s103
    %p112 = scmp.eq.s32.totalorder %s17, 0
    %p113 = por %p111, %p112
    %p114 = scmp.ne.s32.totalorder %s102, %s103
    %p115 = scmp.eq.s32.totalorder %s18, 7
    %p116 = por %p114, %p115
    %p118 = scmp.ne.s32.totalorder %s103, %s117
    %p119 = scmp.eq.s32.totalorder %s18, 0
    %p120 = por %p118, %p119
    %s121 = ssub.s32 %s19, %s31
    %s122 = ssub.s32 %s20, %s27
    %s123 = sor.u32 %s121, %s122
    %p124 = scmp.eq.s32.totalorder %s123, 0
    %s126 = sadd.s32 %s125, 1
    %s127 = scalar_select %p124, %s125, %s126
    %p130 = pneg %p124
    %p131 = scmp.eq.s32.totalorder %s12, 7
    %p132 = por %p130, %p131
    %p133 = scmp.ne.s32.totalorder %s125, %s128
    %p134 = scmp.eq.s32.totalorder %s12, 0
    %p135 = por %p133, %p134
    %p136 = scmp.ne.s32.totalorder %s125, %s128
    %p137 = scmp.eq.s32.totalorder %s17, 7
    %p138 = por %p136, %p137
    %p139 = scmp.ne.s32.totalorder %s128, %s129
    %p140 = scmp.eq.s32.totalorder %s17, 0
    %p141 = por %p139, %p140
    %p142 = scmp.ne.s32.totalorder %s128, %s129
    %p143 = scmp.eq.s32.totalorder %s18, 7
    %p144 = por %p142, %p143
    %p146 = scmp.ne.s32.totalorder %s129, %s145
    %p147 = scmp.eq.s32.totalorder %s18, 0
    %p148 = por %p146, %p147
    %s149 = ssub.s32 %s19, %s31
    %s150 = ssub.s32 %s20, %s27
    %s151 = sor.u32 %s149, %s150
    %p152 = scmp.eq.s32.totalorder %s151, 0
    %s154 = sadd.s32 %s153, 1
    %s155 = scalar_select %p152, %s153, %s154
    %p158 = pneg %p152
    %p159 = scmp.eq.s32.totalorder %s12, 7
    %p160 = por %p158, %p159
    %p161 = scmp.ne.s32.totalorder %s153, %s156
    %p162 = scmp.eq.s32.totalorder %s12, 0
    %p163 = por %p161, %p162
    %p164 = scmp.ne.s32.totalorder %s153, %s156
    %p165 = scmp.eq.s32.totalorder %s17, 7
    %p166 = por %p164, %p165
    %p167 = scmp.ne.s32.totalorder %s156, %s157
    %p168 = scmp.eq.s32.totalorder %s17, 0
    %p169 = por %p167, %p168
    %p170 = scmp.ne.s32.totalorder %s156, %s157
    %p171 = scmp.eq.s32.totalorder %s18, 7
    %p172 = por %p170, %p171
    %p174 = scmp.ne.s32.totalorder %s157, %s173
    %p175 = scmp.eq.s32.totalorder %s18, 0
    %p176 = por %p174, %p175
    %p177 = scmp.le.s32.totalorder 1, %s12
    %p178 = scmp.lt.s32.totalorder %s12, 9
    %p179 = pnand %p177, %p178
    %p180 = pneg %p179
    // Predicated region
    $region9: #{resblock_forward.4} parent=5 // pred_check
      _
    $region10: #{resblock_forward.4} parent=5 // pred_check_branch
      %182 = sbr.rel (%p179) target = $region12
    $region11: #{resblock_forward.4} parent=5 // pred_region
      %s183 = ssub.s32 %s12, 1
      // Predicated region
      $region13: #{resblock_forward.4} parent=11 // pred_check
        %p184 = pneg %p71
      $region14: #{resblock_forward.4} parent=11 // pred_check_branch
        %186 = sbr.rel (%p184) target = $region16
      $region15: #{resblock_forward.4} parent=11 // pred_region
        _
      $region16: #{resblock_forward.4} parent=11 // pred_fallthru
        _
      // Predicated region
      $region17: #{resblock_forward.4} parent=11 // pred_check
        %p187 = pneg %p92
      $region18: #{resblock_forward.4} parent=11 // pred_check_branch
        %189 = sbr.rel (%p187) target = $region20
      $region19: #{resblock_forward.4} parent=11 // pred_region
        _
      $region20: #{resblock_forward.4} parent=11 // pred_fallthru
        _
      // Predicated region
      $region21: #{resblock_forward.4} parent=11 // pred_check
        %p190 = pneg %p113
      $region22: #{resblock_forward.4} parent=11 // pred_check_branch
        %192 = sbr.rel (%p190) target = $region24
      $region23: #{resblock_forward.4} parent=11 // pred_region
        _
      $region24: #{resblock_forward.4} parent=11 // pred_fallthru
        _
    $region12: #{resblock_forward.4} parent=5 // pred_fallthru
      _
    %p193 = scmp.lt.s32.totalorder %s12, 8
    // Predicated region
    $region25: #{resblock_forward.4} parent=5 // pred_check
      %p194 = pneg %p193
    $region26: #{resblock_forward.4} parent=5 // pred_check_branch
      %196 = sbr.rel (%p194) target = $region28
    $region27: #{resblock_forward.4} parent=5 // pred_region
      // Predicated region
      $region29: #{resblock_forward.4} parent=27 // pred_check
        %p197 = pneg %p44
      $region30: #{resblock_forward.4} parent=27 // pred_check_branch
        %199 = sbr.rel (%p197) target = $region32
      $region31: #{resblock_forward.4} parent=27 // pred_region
        %p200 = scmp.lt.s32.totalorder %s19, 1
        %s201 = scalar_select %p200, %s19, 1
        %s202 = smul.addr %s201, 32
        %s203 = smul.addr %s202, 8
        %s204 = scalar_lea.vmem %s0, %s203
      $region32: #{resblock_forward.4} parent=27 // pred_fallthru
        _
    $region28: #{resblock_forward.4} parent=5 // pred_fallthru
      _
    %p205 = scmp.le.s32.totalorder 1, %s12
    %p206 = scmp.lt.s32.totalorder %s12, 9
    %p207 = pnand %p205, %p206
    %p208 = pneg %p207
    // Predicated region
    $region33: #{resblock_forward.4} parent=5 // pred_check
      _
    $region34: #{resblock_forward.4} parent=5 // pred_check_branch
      %210 = sbr.rel (%p207) target = $region36
    $region35: #{resblock_forward.4} parent=5 // pred_region
      %s211 = ssub.s32 %s12, 1
      %p212 = scmp.lt.s32.totalorder %s21, 1
      %s213 = scalar_select %p212, %s21, 1
      %s214 = smul.addr %s213, 32
      %s215 = smul.addr %s214, 8
      %s216 = scalar_lea.vmem %s0, %s215
      %p217 = pneg %p50
      %p218 = pneg %p47
      %p219 = pneg %p71
      %p220 = pneg %p68
      %p221 = pneg %p92
      %p222 = pneg %p89
      %p223 = pneg %p113
      %p224 = pneg %p110
      %p225 = pneg %p141
      %p226 = pneg %p138
      %s227 = smul.u32 4, %s22
      %p228 = scmp.lt.s32.totalorder %s21, 1
      %s229 = scalar_select %p228, %s21, 1
      %p230 = scmp.lt.s32.totalorder %s227, 15
      %s231 = scalar_select %p230, %s227, 15
      %s232 = smul.addr %s231, 2
      %s233 = smul.addr %s229, 32
      %s234 = sadd.s32 %s232, %s233
      %s235 = smul.addr %s234, 8
      %s236 = scalar_lea.vmem %s4, %s235
      %p237 = pneg %p169
      %p238 = pneg %p166
      %p239 = scmp.lt.s32.totalorder %s21, 1
      %s240 = scalar_select %p239, %s21, 1
      %p241 = scmp.lt.s32.totalorder %s22, 3
      %s242 = scalar_select %p241, %s22, 3
      %s243 = smul.addr %s240, 4
      %s244 = sadd.s32 %s242, %s243
      %s245 = smul.addr %s244, 2
      %s246 = scalar_lea.vmem %s5, %s245
      %p247 = scmp.lt.s32.totalorder %s21, 1
      %s248 = scalar_select %p247, %s21, 1
      %s249 = smul.addr %s248, 32
      %s250 = smul.addr %s249, 8
      %s251 = scalar_lea.vmem %s0, %s250
      %s252 = smul.u32 4, %s22
      %p253 = scmp.lt.s32.totalorder %s21, 1
      %s254 = scalar_select %p253, %s21, 1
      %p255 = scmp.lt.s32.totalorder %s252, 15
      %s256 = scalar_select %p255, %s252, 15
      %s257 = smul.addr %s256, 2
      %s258 = smul.addr %s254, 32
      %s259 = sadd.s32 %s257, %s258
      %s260 = smul.addr %s259, 8
      %s261 = scalar_lea.vmem %s4, %s260
      %s262 = smul.u32 4, %s22
      %p263 = scmp.lt.s32.totalorder %s21, 1
      %s264 = scalar_select %p263, %s21, 1
      %p265 = scmp.lt.s32.totalorder %s22, 3
      %s266 = scalar_select %p265, %s22, 3
      %s267 = smul.addr %s264, 4
      %s268 = sadd.s32 %s266, %s267
      %s269 = smul.addr %s268, 2
      %s270 = scalar_lea.vmem %s5, %s269
      %p271 = scmp.eq.s32.totalorder %s22, 0
      // Predicated region
      $region37: #{resblock_forward.4} parent=35 // pred_check
        %p272 = pneg %p271
      $region38: #{resblock_forward.4} parent=35 // pred_check_branch
        %274 = sbr.rel (%p272) target = $region40
      $region39: #{resblock_forward.4} parent=35 // pred_region
        %v275 = vld [vmem:[%s251] sm:$0xff]
        %v276 = vld [vmem:[%s251 + $0x8] sm:$0xff]
        %v277 = vld [vmem:[%s251 + $0x10] sm:$0xff]
        %v278 = vld [vmem:[%s251 + $0x18] sm:$0xff]
        %v279 = vld [vmem:[%s251 + $0x20] sm:$0xff]
        %v280 = vld [vmem:[%s251 + $0x28] sm:$0xff]
        %v281 = vld [vmem:[%s251 + $0x30] sm:$0xff]
        %v282 = vld [vmem:[%s251 + $0x38] sm:$0xff]
        %v283 = vld [vmem:[%s251 + $0x40] sm:$0xff]
        %v284 = vld [vmem:[%s251 + $0x48] sm:$0xff]
        %v285 = vld [vmem:[%s251 + $0x50] sm:$0xff]
        %v286 = vld [vmem:[%s251 + $0x58] sm:$0xff]
        %v287 = vld [vmem:[%s251 + $0x60] sm:$0xff]
        %v288 = vld [vmem:[%s251 + $0x68] sm:$0xff]
        %v289 = vld [vmem:[%s251 + $0x70] sm:$0xff]
        %v290 = vld [vmem:[%s251 + $0x78] sm:$0xff]
        %v291 = vld [vmem:[%s251 + $0x80] sm:$0xff]
        %v292 = vld [vmem:[%s251 + $0x88] sm:$0xff]
        %v293 = vld [vmem:[%s251 + $0x90] sm:$0xff]
        %v294 = vld [vmem:[%s251 + $0x98] sm:$0xff]
        %v295 = vld [vmem:[%s251 + $0xa0] sm:$0xff]
        %v296 = vld [vmem:[%s251 + $0xa8] sm:$0xff]
        %v297 = vld [vmem:[%s251 + $0xb0] sm:$0xff]
        %v298 = vld [vmem:[%s251 + $0xb8] sm:$0xff]
        %v299 = vld [vmem:[%s251 + $0xc0] sm:$0xff]
        %v300 = vld [vmem:[%s251 + $0xc8] sm:$0xff]
        %v301 = vld [vmem:[%s251 + $0xd0] sm:$0xff]
        %v302 = vld [vmem:[%s251 + $0xd8] sm:$0xff]
        %v303 = vld [vmem:[%s251 + $0xe0] sm:$0xff]
        %v304 = vld [vmem:[%s251 + $0xe8] sm:$0xff]
        %v305 = vld [vmem:[%s251 + $0xf0] sm:$0xff]
        %v306 = vld [vmem:[%s251 + $0xf8] sm:$0xff]
        %v307 = vld [vmem:[%s1] sm:$0x1]
        %v309 = vlaneseq
        %v310 = vshrl.u32 %v309, 7
        %v311 = vsub.s32 0, %v310
        %v312 = vrot.slane %v307, %v311
        %v314 = vmul.f32 %v275, %v312
        %v315 = vmul.f32 %v276, %v312
        %v316 = vmul.f32 %v277, %v312
        %v317 = vmul.f32 %v278, %v312
        %v318 = vmul.f32 %v279, %v312
        %v319 = vmul.f32 %v280, %v312
        %v320 = vmul.f32 %v281, %v312
        %v321 = vmul.f32 %v282, %v312
        %v322 = vmul.f32 %v283, %v312
        %v323 = vmul.f32 %v284, %v312
        %v324 = vmul.f32 %v285, %v312
        %v325 = vmul.f32 %v286, %v312
        %v326 = vmul.f32 %v287, %v312
        %v327 = vmul.f32 %v288, %v312
        %v328 = vmul.f32 %v289, %v312
        %v329 = vmul.f32 %v290, %v312
        %v330 = vmul.f32 %v291, %v312
        %v331 = vmul.f32 %v292, %v312
        %v332 = vmul.f32 %v293, %v312
        %v333 = vmul.f32 %v294, %v312
        %v334 = vmul.f32 %v295, %v312
        %v335 = vmul.f32 %v296, %v312
        %v336 = vmul.f32 %v297, %v312
        %v337 = vmul.f32 %v298, %v312
        %v338 = vmul.f32 %v299, %v312
        %v339 = vmul.f32 %v300, %v312
        %v340 = vmul.f32 %v301, %v312
        %v341 = vmul.f32 %v302, %v312
        %v342 = vmul.f32 %v303, %v312
        %v343 = vmul.f32 %v304, %v312
        %v344 = vmul.f32 %v305, %v312
        %v345 = vmul.f32 %v306, %v312
        %v346 = vld [vmem:[%s2] sm:$0x1]
        %v348 = vlaneseq
        %v349 = vshrl.u32 %v348, 7
        %v350 = vsub.s32 0, %v349
        %v351 = vrot.slane %v346, %v350
        %v353 = vadd.f32 %v314, %v351
        %v354 = vadd.f32 %v315, %v351
        %v355 = vadd.f32 %v316, %v351
        %v356 = vadd.f32 %v317, %v351
        %v357 = vadd.f32 %v318, %v351
        %v358 = vadd.f32 %v319, %v351
        %v359 = vadd.f32 %v320, %v351
        %v360 = vadd.f32 %v321, %v351
        %v361 = vadd.f32 %v322, %v351
        %v362 = vadd.f32 %v323, %v351
        %v363 = vadd.f32 %v324, %v351
        %v364 = vadd.f32 %v325, %v351
        %v365 = vadd.f32 %v326, %v351
        %v366 = vadd.f32 %v327, %v351
        %v367 = vadd.f32 %v328, %v351
        %v368 = vadd.f32 %v329, %v351
        %v369 = vadd.f32 %v330, %v351
        %v370 = vadd.f32 %v331, %v351
        %v371 = vadd.f32 %v332, %v351
        %v372 = vadd.f32 %v333, %v351
        %v373 = vadd.f32 %v334, %v351
        %v374 = vadd.f32 %v335, %v351
        %v375 = vadd.f32 %v336, %v351
        %v376 = vadd.f32 %v337, %v351
        %v377 = vadd.f32 %v338, %v351
        %v378 = vadd.f32 %v339, %v351
        %v379 = vadd.f32 %v340, %v351
        %v380 = vadd.f32 %v341, %v351
        %v381 = vadd.f32 %v342, %v351
        %v382 = vadd.f32 %v343, %v351
        %v383 = vadd.f32 %v344, %v351
        %v384 = vadd.f32 %v345, %v351
        %vm385 = vcmp.gt.f32.partialorder %v353, 0.0
        %vm386 = vcmp.gt.f32.partialorder %v354, 0.0
        %vm387 = vcmp.gt.f32.partialorder %v355, 0.0
        %vm388 = vcmp.gt.f32.partialorder %v356, 0.0
        %vm389 = vcmp.gt.f32.partialorder %v357, 0.0
        %vm390 = vcmp.gt.f32.partialorder %v358, 0.0
        %vm391 = vcmp.gt.f32.partialorder %v359, 0.0
        %vm392 = vcmp.gt.f32.partialorder %v360, 0.0
        %vm393 = vcmp.gt.f32.partialorder %v361, 0.0
        %vm394 = vcmp.gt.f32.partialorder %v362, 0.0
        %vm395 = vcmp.gt.f32.partialorder %v363, 0.0
        %vm396 = vcmp.gt.f32.partialorder %v364, 0.0
        %vm397 = vcmp.gt.f32.partialorder %v365, 0.0
        %vm398 = vcmp.gt.f32.partialorder %v366, 0.0
        %vm399 = vcmp.gt.f32.partialorder %v367, 0.0
        %vm400 = vcmp.gt.f32.partialorder %v368, 0.0
        %vm401 = vcmp.gt.f32.partialorder %v369, 0.0
        %vm402 = vcmp.gt.f32.partialorder %v370, 0.0
        %vm403 = vcmp.gt.f32.partialorder %v371, 0.0
        %vm404 = vcmp.gt.f32.partialorder %v372, 0.0
        %vm405 = vcmp.gt.f32.partialorder %v373, 0.0
        %vm406 = vcmp.gt.f32.partialorder %v374, 0.0
        %vm407 = vcmp.gt.f32.partialorder %v375, 0.0
        %vm408 = vcmp.gt.f32.partialorder %v376, 0.0
        %vm409 = vcmp.gt.f32.partialorder %v377, 0.0
        %vm410 = vcmp.gt.f32.partialorder %v378, 0.0
        %vm411 = vcmp.gt.f32.partialorder %v379, 0.0
        %vm412 = vcmp.gt.f32.partialorder %v380, 0.0
        %vm413 = vcmp.gt.f32.partialorder %v381, 0.0
        %vm414 = vcmp.gt.f32.partialorder %v382, 0.0
        %vm415 = vcmp.gt.f32.partialorder %v383, 0.0
        %vm416 = vcmp.gt.f32.partialorder %v384, 0.0
        %v417 = vmul.f32 %v353, 0.1
        %v418 = vmul.f32 %v354, 0.1
        %v419 = vmul.f32 %v355, 0.1
        %v420 = vmul.f32 %v356, 0.1
        %v421 = vmul.f32 %v357, 0.1
        %v422 = vmul.f32 %v358, 0.1
        %v423 = vmul.f32 %v359, 0.1
        %v424 = vmul.f32 %v360, 0.1
        %v425 = vmul.f32 %v361, 0.1
        %v426 = vmul.f32 %v362, 0.1
        %v427 = vmul.f32 %v363, 0.1
        %v428 = vmul.f32 %v364, 0.1
        %v429 = vmul.f32 %v365, 0.1
        %v430 = vmul.f32 %v366, 0.1
        %v431 = vmul.f32 %v367, 0.1
        %v432 = vmul.f32 %v368, 0.1
        %v433 = vmul.f32 %v369, 0.1
        %v434 = vmul.f32 %v370, 0.1
        %v435 = vmul.f32 %v371, 0.1
        %v436 = vmul.f32 %v372, 0.1
        %v437 = vmul.f32 %v373, 0.1
        %v438 = vmul.f32 %v374, 0.1
        %v439 = vmul.f32 %v375, 0.1
        %v440 = vmul.f32 %v376, 0.1
        %v441 = vmul.f32 %v377, 0.1
        %v442 = vmul.f32 %v378, 0.1
        %v443 = vmul.f32 %v379, 0.1
        %v444 = vmul.f32 %v380, 0.1
        %v445 = vmul.f32 %v381, 0.1
        %v446 = vmul.f32 %v382, 0.1
        %v447 = vmul.f32 %v383, 0.1
        %v448 = vmul.f32 %v384, 0.1
        %v449 = vsel %vm385, %v353, %v417
        %v450 = vsel %vm386, %v354, %v418
        %v451 = vsel %vm387, %v355, %v419
        %v452 = vsel %vm388, %v356, %v420
        %v453 = vsel %vm389, %v357, %v421
        %v454 = vsel %vm390, %v358, %v422
        %v455 = vsel %vm391, %v359, %v423
        %v456 = vsel %vm392, %v360, %v424
        %v457 = vsel %vm393, %v361, %v425
        %v458 = vsel %vm394, %v362, %v426
        %v459 = vsel %vm395, %v363, %v427
        %v460 = vsel %vm396, %v364, %v428
        %v461 = vsel %vm397, %v365, %v429
        %v462 = vsel %vm398, %v366, %v430
        %v463 = vsel %vm399, %v367, %v431
        %v464 = vsel %vm400, %v368, %v432
        %v465 = vsel %vm401, %v369, %v433
        %v466 = vsel %vm402, %v370, %v434
        %v467 = vsel %vm403, %v371, %v435
        %v468 = vsel %vm404, %v372, %v436
        %v469 = vsel %vm405, %v373, %v437
        %v470 = vsel %vm406, %v374, %v438
        %v471 = vsel %vm407, %v375, %v439
        %v472 = vsel %vm408, %v376, %v440
        %v473 = vsel %vm409, %v377, %v441
        %v474 = vsel %vm410, %v378, %v442
        %v475 = vsel %vm411, %v379, %v443
        %v476 = vsel %vm412, %v380, %v444
        %v477 = vsel %vm413, %v381, %v445
        %v478 = vsel %vm414, %v382, %v446
        %v479 = vsel %vm415, %v383, %v447
        %v480 = vsel %vm416, %v384, %v448
        %vm481 = vcmask 31744
        %482 = vst.msk [vmem:[#allocation2] sm:$0xff] %vm481, 0.0
        %483 = vst.msk [vmem:[#allocation2 + $0x8] sm:$0xff] %vm481, 0.0
        %vm484 = vcmask 25600
        %485 = vst.msk [vmem:[#allocation2 + $0x10] sm:$0x3] %vm484, 0.0
        %486 = vst.msk [vmem:[#allocation2 + $0x18] sm:$0xff] %vm481, 0.0
        %487 = vst.msk [vmem:[#allocation2 + $0x20] sm:$0xff] %vm481, 0.0
        %488 = vst.msk [vmem:[#allocation2 + $0x28] sm:$0x3] %vm484, 0.0
        %489 = vst.msk [vmem:[#allocation2 + $0x30] sm:$0xff] %vm481, 0.0
        %490 = vst.msk [vmem:[#allocation2 + $0x38] sm:$0xff] %vm481, 0.0
        %491 = vst.msk [vmem:[#allocation2 + $0x40] sm:$0x3] %vm484, 0.0
        %492 = vst.msk [vmem:[#allocation2 + $0x48] sm:$0xff] %vm481, 0.0
        %493 = vst.msk [vmem:[#allocation2 + $0x50] sm:$0xff] %vm481, 0.0
        %494 = vst.msk [vmem:[#allocation2 + $0x58] sm:$0x3] %vm484, 0.0
        %495 = vst.msk [vmem:[#allocation2 + $0x60] sm:$0xff] %vm481, 0.0
        %496 = vst.msk [vmem:[#allocation2 + $0x68] sm:$0xff] %vm481, 0.0
        %497 = vst.msk [vmem:[#allocation2 + $0x70] sm:$0x3] %vm484, 0.0
        %498 = vst.msk [vmem:[#allocation2 + $0x78] sm:$0xff] %vm481, 0.0
        %499 = vst.msk [vmem:[#allocation2 + $0x80] sm:$0xff] %vm481, 0.0
        %500 = vst.msk [vmem:[#allocation2 + $0x88] sm:$0x3] %vm484, 0.0
        %501 = vst.msk [vmem:[#allocation2 + $0x90] sm:$0xff] %vm481, 0.0
        %502 = vst.msk [vmem:[#allocation2 + $0x98] sm:$0xff] %vm481, 0.0
        %503 = vst.msk [vmem:[#allocation2 + $0xa0] sm:$0x3] %vm484, 0.0
        %504 = vst.msk [vmem:[#allocation2 + $0xa8] sm:$0xff] %vm481, 0.0
        %505 = vst.msk [vmem:[#allocation2 + $0xb0] sm:$0xff] %vm481, 0.0
        %506 = vst.msk [vmem:[#allocation2 + $0xb8] sm:$0x3] %vm484, 0.0
        %507 = vst.msk [vmem:[#allocation2 + $0xc0] sm:$0xff] %vm481, 0.0
        %508 = vst.msk [vmem:[#allocation2 + $0xc8] sm:$0xff] %vm481, 0.0
        %509 = vst.msk [vmem:[#allocation2 + $0xd0] sm:$0x3] %vm484, 0.0
        %510 = vst.msk [vmem:[#allocation2 + $0xd8] sm:$0xff] %vm481, 0.0
        %511 = vst.msk [vmem:[#allocation2 + $0xe0] sm:$0xff] %vm481, 0.0
        %512 = vst.msk [vmem:[#allocation2 + $0xe8] sm:$0x3] %vm484, 0.0
        %513 = vst.msk [vmem:[#allocation2 + $0xf0] sm:$0xff] %vm481, 0.0
        %514 = vst.msk [vmem:[#allocation2 + $0xf8] sm:$0xff] %vm481, 0.0
        %515 = vst.msk [vmem:[#allocation2 + $0x100] sm:$0x3] %vm484, 0.0
        %516 = vst.msk [vmem:[#allocation2 + $0x108] sm:$0xff] %vm481, 0.0
        %517 = vst.msk [vmem:[#allocation2 + $0x110] sm:$0xff] %vm481, 0.0
        %518 = vst.msk [vmem:[#allocation2 + $0x118] sm:$0x3] %vm484, 0.0
        %519 = vst.msk [vmem:[#allocation2 + $0x120] sm:$0xff] %vm481, 0.0
        %520 = vst.msk [vmem:[#allocation2 + $0x128] sm:$0xff] %vm481, 0.0
        %521 = vst.msk [vmem:[#allocation2 + $0x130] sm:$0x3] %vm484, 0.0
        %522 = vst.msk [vmem:[#allocation2 + $0x138] sm:$0xff] %vm481, 0.0
        %523 = vst.msk [vmem:[#allocation2 + $0x140] sm:$0xff] %vm481, 0.0
        %524 = vst.msk [vmem:[#allocation2 + $0x148] sm:$0x3] %vm484, 0.0
        %525 = vst.msk [vmem:[#allocation2 + $0x150] sm:$0xff] %vm481, 0.0
        %526 = vst.msk [vmem:[#allocation2 + $0x158] sm:$0xff] %vm481, 0.0
        %527 = vst.msk [vmem:[#allocation2 + $0x160] sm:$0x3] %vm484, 0.0
        %528 = vst.msk [vmem:[#allocation2 + $0x168] sm:$0xff] %vm481, 0.0
        %529 = vst.msk [vmem:[#allocation2 + $0x170] sm:$0xff] %vm481, 0.0
        %530 = vst.msk [vmem:[#allocation2 + $0x178] sm:$0x3] %vm484, 0.0
        %531 = vst.msk [vmem:[#allocation2 + $0x180] sm:$0xff] %vm481, 0.0
        %532 = vst.msk [vmem:[#allocation2 + $0x188] sm:$0xff] %vm481, 0.0
        %533 = vst.msk [vmem:[#allocation2 + $0x190] sm:$0x3] %vm484, 0.0
        %534 = vst.msk [vmem:[#allocation2 + $0x198] sm:$0xff] %vm481, 0.0
        %535 = vst.msk [vmem:[#allocation2 + $0x1a0] sm:$0xff] %vm481, 0.0
        %536 = vst.msk [vmem:[#allocation2 + $0x1a8] sm:$0x3] %vm484, 0.0
        %s537 = scalar_lea.vmem [#allocation2], 24
        %538 = vst.msk [vmem:[%s537 + $0x1] sm:$0xff] %vm481, %v449
        %539 = vst.msk [vmem:[%s537 + $0x9] sm:$0xff] %vm481, %v450
        %540 = vst.msk [vmem:[%s537 + $0x19] sm:$0xff] %vm481, %v451
        %541 = vst.msk [vmem:[%s537 + $0x21] sm:$0xff] %vm481, %v452
        %542 = vst.msk [vmem:[%s537 + $0x31] sm:$0xff] %vm481, %v453
        %543 = vst.msk [vmem:[%s537 + $0x39] sm:$0xff] %vm481, %v454
        %544 = vst.msk [vmem:[%s537 + $0x49] sm:$0xff] %vm481, %v455
        %545 = vst.msk [vmem:[%s537 + $0x51] sm:$0xff] %vm481, %v456
        %546 = vst.msk [vmem:[%s537 + $0x61] sm:$0xff] %vm481, %v457
        %547 = vst.msk [vmem:[%s537 + $0x69] sm:$0xff] %vm481, %v458
        %548 = vst.msk [vmem:[%s537 + $0x79] sm:$0xff] %vm481, %v459
        %549 = vst.msk [vmem:[%s537 + $0x81] sm:$0xff] %vm481, %v460
        %550 = vst.msk [vmem:[%s537 + $0x91] sm:$0xff] %vm481, %v461
        %551 = vst.msk [vmem:[%s537 + $0x99] sm:$0xff] %vm481, %v462
        %552 = vst.msk [vmem:[%s537 + $0xa9] sm:$0xff] %vm481, %v463
        %553 = vst.msk [vmem:[%s537 + $0xb1] sm:$0xff] %vm481, %v464
        %554 = vst.msk [vmem:[%s537 + $0xc1] sm:$0xff] %vm481, %v465
        %555 = vst.msk [vmem:[%s537 + $0xc9] sm:$0xff] %vm481, %v466
        %556 = vst.msk [vmem:[%s537 + $0xd9] sm:$0xff] %vm481, %v467
        %557 = vst.msk [vmem:[%s537 + $0xe1] sm:$0xff] %vm481, %v468
        %558 = vst.msk [vmem:[%s537 + $0xf1] sm:$0xff] %vm481, %v469
        %559 = vst.msk [vmem:[%s537 + $0xf9] sm:$0xff] %vm481, %v470
        %560 = vst.msk [vmem:[%s537 + $0x109] sm:$0xff] %vm481, %v471
        %561 = vst.msk [vmem:[%s537 + $0x111] sm:$0xff] %vm481, %v472
        %562 = vst.msk [vmem:[%s537 + $0x121] sm:$0xff] %vm481, %v473
        %563 = vst.msk [vmem:[%s537 + $0x129] sm:$0xff] %vm481, %v474
        %564 = vst.msk [vmem:[%s537 + $0x139] sm:$0xff] %vm481, %v475
        %565 = vst.msk [vmem:[%s537 + $0x141] sm:$0xff] %vm481, %v476
        %566 = vst.msk [vmem:[%s537 + $0x151] sm:$0xff] %vm481, %v477
        %567 = vst.msk [vmem:[%s537 + $0x159] sm:$0xff] %vm481, %v478
        %568 = vst.msk [vmem:[%s537 + $0x169] sm:$0xff] %vm481, %v479
        %569 = vst.msk [vmem:[%s537 + $0x171] sm:$0xff] %vm481, %v480
      $region40: #{resblock_forward.4} parent=35 // pred_fallthru
        _
      %s570 = smul.u32 %s22, 4
      %s571 = smul.u32 %s570, 24
      %s572 = scalar_lea.vmem [#allocation2], %s571
      %v573 = vld [vmem:[%s572] sm:$0xff]
      %v574 = vld [vmem:[%s572 + $0x8] sm:$0xff]
      %v575 = vld [vmem:[%s572 + $0x18] sm:$0xff]
      %v576 = vld [vmem:[%s572 + $0x20] sm:$0xff]
      %v577 = vld [vmem:[%s572 + $0x30] sm:$0xff]
      %v578 = vld [vmem:[%s572 + $0x38] sm:$0xff]
      %v579 = vld [vmem:[%s572 + $0x48] sm:$0xff]
      %v580 = vld [vmem:[%s572 + $0x50] sm:$0xff]
      %v581 = vld [vmem:[%s572 + $0x1] sm:$0xff]
      %v582 = vld [vmem:[%s572 + $0x9] sm:$0xff]
      %v583 = vld [vmem:[%s572 + $0x19] sm:$0xff]
      %v584 = vld [vmem:[%s572 + $0x21] sm:$0xff]
      %v585 = vld [vmem:[%s572 + $0x31] sm:$0xff]
      %v586 = vld [vmem:[%s572 + $0x39] sm:$0xff]
      %v587 = vld [vmem:[%s572 + $0x49] sm:$0xff]
      %v588 = vld [vmem:[%s572 + $0x51] sm:$0xff]
      %v589 = vld [vmem:[%s572 + $0x2] sm:$0xff]
      %v590 = vld [vmem:[%s572 + $0xa] sm:$0xff]
      %v591 = vld [vmem:[%s572 + $0x1a] sm:$0xff]
      %v592 = vld [vmem:[%s572 + $0x22] sm:$0xff]
      %v593 = vld [vmem:[%s572 + $0x32] sm:$0xff]
      %v594 = vld [vmem:[%s572 + $0x3a] sm:$0xff]
      %v595 = vld [vmem:[%s572 + $0x4a] sm:$0xff]
      %v596 = vld [vmem:[%s572 + $0x52] sm:$0xff]
      %s597 = sadd.s32 %s570, 1
      %s598 = smul.u32 %s597, 24
      %s599 = scalar_lea.vmem [#allocation2], %s598
      %v600 = vld [vmem:[%s599] sm:$0xff]
      %v601 = vld [vmem:[%s599 + $0x8] sm:$0xff]
      %v602 = vld [vmem:[%s599 + $0x18] sm:$0xff]
      %v603 = vld [vmem:[%s599 + $0x20] sm:$0xff]
      %v604 = vld [vmem:[%s599 + $0x30] sm:$0xff]
      %v605 = vld [vmem:[%s599 + $0x38] sm:$0xff]
      %v606 = vld [vmem:[%s599 + $0x48] sm:$0xff]
      %v607 = vld [vmem:[%s599 + $0x50] sm:$0xff]
      %v608 = vld [vmem:[%s599 + $0x1] sm:$0xff]
      %v609 = vld [vmem:[%s599 + $0x9] sm:$0xff]
      %v610 = vld [vmem:[%s599 + $0x19] sm:$0xff]
      %v611 = vld [vmem:[%s599 + $0x21] sm:$0xff]
      %v612 = vld [vmem:[%s599 + $0x31] sm:$0xff]
      %v613 = vld [vmem:[%s599 + $0x39] sm:$0xff]
      %v614 = vld [vmem:[%s599 + $0x49] sm:$0xff]
      %v615 = vld [vmem:[%s599 + $0x51] sm:$0xff]
      %v616 = vld [vmem:[%s599 + $0x2] sm:$0xff]
      %v617 = vld [vmem:[%s599 + $0xa] sm:$0xff]
      %v618 = vld [vmem:[%s599 + $0x1a] sm:$0xff]
      %v619 = vld [vmem:[%s599 + $0x22] sm:$0xff]
      %v620 = vld [vmem:[%s599 + $0x32] sm:$0xff]
      %v621 = vld [vmem:[%s599 + $0x3a] sm:$0xff]
      %v622 = vld [vmem:[%s599 + $0x4a] sm:$0xff]
      %v623 = vld [vmem:[%s599 + $0x52] sm:$0xff]
      %s624 = sadd.s32 %s570, 2
      %s625 = smul.u32 %s624, 24
      %s626 = scalar_lea.vmem [#allocation2], %s625
      %v627 = vld [vmem:[%s626] sm:$0xff]
      %v628 = vld [vmem:[%s626 + $0x8] sm:$0xff]
      %v629 = vld [vmem:[%s626 + $0x18] sm:$0xff]
      %v630 = vld [vmem:[%s626 + $0x20] sm:$0xff]
      %v631 = vld [vmem:[%s626 + $0x30] sm:$0xff]
      %v632 = vld [vmem:[%s626 + $0x38] sm:$0xff]
      %v633 = vld [vmem:[%s626 + $0x48] sm:$0xff]
      %v634 = vld [vmem:[%s626 + $0x50] sm:$0xff]
      %v635 = vld [vmem:[%s626 + $0x1] sm:$0xff]
      %v636 = vld [vmem:[%s626 + $0x9] sm:$0xff]
      %v637 = vld [vmem:[%s626 + $0x19] sm:$0xff]
      %v638 = vld [vmem:[%s626 + $0x21] sm:$0xff]
      %v639 = vld [vmem:[%s626 + $0x31] sm:$0xff]
      %v640 = vld [vmem:[%s626 + $0x39] sm:$0xff]
      %v641 = vld [vmem:[%s626 + $0x49] sm:$0xff]
      %v642 = vld [vmem:[%s626 + $0x51] sm:$0xff]
      %v643 = vld [vmem:[%s626 + $0x2] sm:$0xff]
      %v644 = vld [vmem:[%s626 + $0xa] sm:$0xff]
      %v645 = vld [vmem:[%s626 + $0x1a] sm:$0xff]
      %v646 = vld [vmem:[%s626 + $0x22] sm:$0xff]
      %v647 = vld [vmem:[%s626 + $0x32] sm:$0xff]
      %v648 = vld [vmem:[%s626 + $0x3a] sm:$0xff]
      %v649 = vld [vmem:[%s626 + $0x4a] sm:$0xff]
      %v650 = vld [vmem:[%s626 + $0x52] sm:$0xff]
      %659 = vrot.lane.b32.xlu0 %v581, 4
      %v660 = vpop.permute.xlu0 %659
      %661 = vrot.lane.b32.xlu0 %v582, 4
      %v662 = vpop.permute.xlu0 %661
      %663 = vrot.lane.b32.xlu0 %v583, 4
      %v664 = vpop.permute.xlu0 %663
      %665 = vrot.lane.b32.xlu0 %v584, 4
      %v666 = vpop.permute.xlu0 %665
      %667 = vrot.lane.b32.xlu0 %v585, 4
      %v668 = vpop.permute.xlu0 %667
      %669 = vrot.lane.b32.xlu0 %v586, 4
      %v670 = vpop.permute.xlu0 %669
      %671 = vrot.lane.b32.xlu0 %v587, 4
      %v672 = vpop.permute.xlu0 %671
      %673 = vrot.lane.b32.xlu0 %v588, 4
      %v674 = vpop.permute.xlu0 %673
      %691 = vrot.lane.b32.xlu0 %v589, 8
      %v692 = vpop.permute.xlu0 %691
      %693 = vrot.lane.b32.xlu0 %v590, 8
      %v694 = vpop.permute.xlu0 %693
      %695 = vrot.lane.b32.xlu0 %v591, 8
      %v696 = vpop.permute.xlu0 %695
      %697 = vrot.lane.b32.xlu0 %v592, 8
      %v698 = vpop.permute.xlu0 %697
      %699 = vrot.lane.b32.xlu0 %v593, 8
      %v700 = vpop.permute.xlu0 %699
      %701 = vrot.lane.b32.xlu0 %v594, 8
      %v702 = vpop.permute.xlu0 %701
      %703 = vrot.lane.b32.xlu0 %v595, 8
      %v704 = vpop.permute.xlu0 %703
      %705 = vrot.lane.b32.xlu0 %v596, 8
      %v706 = vpop.permute.xlu0 %705
      %723 = vrot.lane.b32.xlu0 %v600, 12
      %v724 = vpop.permute.xlu0 %723
      %725 = vrot.lane.b32.xlu0 %v601, 12
      %v726 = vpop.permute.xlu0 %725
      %727 = vrot.lane.b32.xlu0 %v602, 12
      %v728 = vpop.permute.xlu0 %727
      %729 = vrot.lane.b32.xlu0 %v603, 12
      %v730 = vpop.permute.xlu0 %729
      %731 = vrot.lane.b32.xlu0 %v604, 12
      %v732 = vpop.permute.xlu0 %731
      %733 = vrot.lane.b32.xlu0 %v605, 12
      %v734 = vpop.permute.xlu0 %733
      %735 = vrot.lane.b32.xlu0 %v606, 12
      %v736 = vpop.permute.xlu0 %735
      %737 = vrot.lane.b32.xlu0 %v607, 12
      %v738 = vpop.permute.xlu0 %737
      %755 = vrot.lane.b32.xlu0 %v608, 16
      %v756 = vpop.permute.xlu0 %755
      %757 = vrot.lane.b32.xlu0 %v609, 16
      %v758 = vpop.permute.xlu0 %757
      %759 = vrot.lane.b32.xlu0 %v610, 16
      %v760 = vpop.permute.xlu0 %759
      %761 = vrot.lane.b32.xlu0 %v611, 16
      %v762 = vpop.permute.xlu0 %761
      %763 = vrot.lane.b32.xlu0 %v612, 16
      %v764 = vpop.permute.xlu0 %763
      %765 = vrot.lane.b32.xlu0 %v613, 16
      %v766 = vpop.permute.xlu0 %765
      %767 = vrot.lane.b32.xlu0 %v614, 16
      %v768 = vpop.permute.xlu0 %767
      %769 = vrot.lane.b32.xlu0 %v615, 16
      %v770 = vpop.permute.xlu0 %769
      %787 = vrot.lane.b32.xlu0 %v616, 20
      %v788 = vpop.permute.xlu0 %787
      %789 = vrot.lane.b32.xlu0 %v617, 20
      %v790 = vpop.permute.xlu0 %789
      %791 = vrot.lane.b32.xlu0 %v618, 20
      %v792 = vpop.permute.xlu0 %791
      %793 = vrot.lane.b32.xlu0 %v619, 20
      %v794 = vpop.permute.xlu0 %793
      %795 = vrot.lane.b32.xlu0 %v620, 20
      %v796 = vpop.permute.xlu0 %795
      %797 = vrot.lane.b32.xlu0 %v621, 20
      %v798 = vpop.permute.xlu0 %797
      %799 = vrot.lane.b32.xlu0 %v622, 20
      %v800 = vpop.permute.xlu0 %799
      %801 = vrot.lane.b32.xlu0 %v623, 20
      %v802 = vpop.permute.xlu0 %801
      %819 = vrot.lane.b32.xlu0 %v627, 24
      %v820 = vpop.permute.xlu0 %819
      %821 = vrot.lane.b32.xlu0 %v628, 24
      %v822 = vpop.permute.xlu0 %821
      %823 = vrot.lane.b32.xlu0 %v629, 24
      %v824 = vpop.permute.xlu0 %823
      %825 = vrot.lane.b32.xlu0 %v630, 24
      %v826 = vpop.permute.xlu0 %825
      %827 = vrot.lane.b32.xlu0 %v631, 24
      %v828 = vpop.permute.xlu0 %827
      %829 = vrot.lane.b32.xlu0 %v632, 24
      %v830 = vpop.permute.xlu0 %829
      %831 = vrot.lane.b32.xlu0 %v633, 24
      %v832 = vpop.permute.xlu0 %831
      %833 = vrot.lane.b32.xlu0 %v634, 24
      %v834 = vpop.permute.xlu0 %833
      %851 = vrot.lane.b32.xlu0 %v635, 28
      %v852 = vpop.permute.xlu0 %851
      %853 = vrot.lane.b32.xlu0 %v636, 28
      %v854 = vpop.permute.xlu0 %853
      %855 = vrot.lane.b32.xlu0 %v637, 28
      %v856 = vpop.permute.xlu0 %855
      %857 = vrot.lane.b32.xlu0 %v638, 28
      %v858 = vpop.permute.xlu0 %857
      %859 = vrot.lane.b32.xlu0 %v639, 28
      %v860 = vpop.permute.xlu0 %859
      %861 = vrot.lane.b32.xlu0 %v640, 28
      %v862 = vpop.permute.xlu0 %861
      %863 = vrot.lane.b32.xlu0 %v641, 28
      %v864 = vpop.permute.xlu0 %863
      %865 = vrot.lane.b32.xlu0 %v642, 28
      %v866 = vpop.permute.xlu0 %865
      %883 = vrot.lane.b32.xlu0 %v643, 32
      %v884 = vpop.permute.xlu0 %883
      %885 = vrot.lane.b32.xlu0 %v644, 32
      %v886 = vpop.permute.xlu0 %885
      %887 = vrot.lane.b32.xlu0 %v645, 32
      %v888 = vpop.permute.xlu0 %887
      %889 = vrot.lane.b32.xlu0 %v646, 32
      %v890 = vpop.permute.xlu0 %889
      %891 = vrot.lane.b32.xlu0 %v647, 32
      %v892 = vpop.permute.xlu0 %891
      %893 = vrot.lane.b32.xlu0 %v648, 32
      %v894 = vpop.permute.xlu0 %893
      %895 = vrot.lane.b32.xlu0 %v649, 32
      %v896 = vpop.permute.xlu0 %895
      %897 = vrot.lane.b32.xlu0 %v650, 32
      %v898 = vpop.permute.xlu0 %897
      %vm907 = vcmask 31744
      %v908 = vsel %vm907, %v573, %v660
      %v909 = vsel %vm907, %v574, %v662
      %v910 = vsel %vm907, %v575, %v664
      %v911 = vsel %vm907, %v576, %v666
      %v912 = vsel %vm907, %v577, %v668
      %v913 = vsel %vm907, %v578, %v670
      %v914 = vsel %vm907, %v579, %v672
      %v915 = vsel %vm907, %v580, %v674
      %vm916 = vcmask 64512
      %v917 = vsel %vm916, %v908, %v692
      %v918 = vsel %vm916, %v909, %v694
      %v919 = vsel %vm916, %v910, %v696
      %v920 = vsel %vm916, %v911, %v698
      %v921 = vsel %vm916, %v912, %v700
      %v922 = vsel %vm916, %v913, %v702
      %v923 = vsel %vm916, %v914, %v704
      %v924 = vsel %vm916, %v915, %v706
      %vm925 = vcmask 97280
      %v926 = vsel %vm925, %v917, %v724
      %v927 = vsel %vm925, %v918, %v726
      %v928 = vsel %vm925, %v919, %v728
      %v929 = vsel %vm925, %v920, %v730
      %v930 = vsel %vm925, %v921, %v732
      %v931 = vsel %vm925, %v922, %v734
      %v932 = vsel %vm925, %v923, %v736
      %v933 = vsel %vm925, %v924, %v738
      %vm934 = vcmask 130048
      %v935 = vsel %vm934, %v926, %v756
      %v936 = vsel %vm934, %v927, %v758
      %v937 = vsel %vm934, %v928, %v760
      %v938 = vsel %vm934, %v929, %v762
      %v939 = vsel %vm934, %v930, %v764
      %v940 = vsel %vm934, %v931, %v766
      %v941 = vsel %vm934, %v932, %v768
      %v942 = vsel %vm934, %v933, %v770
      %vm943 = vcmask 162816
      %v944 = vsel %vm943, %v935, %v788
      %v945 = vsel %vm943, %v936, %v790
      %v946 = vsel %vm943, %v937, %v792
      %v947 = vsel %vm943, %v938, %v794
      %v948 = vsel %vm943, %v939, %v796
      %v949 = vsel %vm943, %v940, %v798
      %v950 = vsel %vm943, %v941, %v800
      %v951 = vsel %vm943, %v942, %v802
      %vm952 = vcmask 195584
      %v953 = vsel %vm952, %v944, %v820
      %v954 = vsel %vm952, %v945, %v822
      %v955 = vsel %vm952, %v946, %v824
      %v956 = vsel %vm952, %v947, %v826
      %v957 = vsel %vm952, %v948, %v828
      %v958 = vsel %vm952, %v949, %v830
      %v959 = vsel %vm952, %v950, %v832
      %v960 = vsel %vm952, %v951, %v834
      %vm961 = vcmask 228352
      %v962 = vsel %vm961, %v953, %v852
      %v963 = vsel %vm961, %v954, %v854
      %v964 = vsel %vm961, %v955, %v856
      %v965 = vsel %vm961, %v956, %v858
      %v966 = vsel %vm961, %v957, %v860
      %v967 = vsel %vm961, %v958, %v862
      %v968 = vsel %vm961, %v959, %v864
      %v969 = vsel %vm961, %v960, %v866
      %vm970 = vcmask 261120
      %v971 = vsel %vm970, %v962, %v884
      %v972 = vsel %vm970, %v963, %v886
      %v973 = vsel %vm970, %v964, %v888
      %v974 = vsel %vm970, %v965, %v890
      %v975 = vsel %vm970, %v966, %v892
      %v976 = vsel %vm970, %v967, %v894
      %v977 = vsel %vm970, %v968, %v896
      %v978 = vsel %vm970, %v969, %v898
      %v979 = vld [vmem:[%s3] sm:$0xff]
      %v980 = vld [vmem:[%s3 + $0x8] sm:$0xff]
      %v981 = vld [vmem:[%s3 + $0x10] sm:$0xff]
      %v982 = vld [vmem:[%s3 + $0x18] sm:$0xff]
      %v983 = vld [vmem:[%s3 + $0x20] sm:$0xf]
      %vm984 = vcmask 293888
      %v986 = vsel %vm984, %v971, 0
      %v989 = vsel %vm984, %v972, 0
      %v992 = vsel %vm984, %v973, 0
      %v995 = vsel %vm984, %v974, 0
      %v998 = vsel %vm984, %v975, 0
      %v1001 = vsel %vm984, %v976, 0
      %v1004 = vsel %vm984, %v977, 0
      %v1007 = vsel %vm984, %v978, 0
      %vm1009 = vcmask 1043456
      %v1011 = vsel %vm1009, %v983, 0
      %1013 = vmatprep.subr.mxu0 0.0
      %1014 = vmatpush1.msra.mxu0 0.0
      %1015 = vmatprep.subr.mxu0 0.0
      %1016 = vmatpush1.msra.mxu0 0.0
      %1017 = vmatprep.subr.mxu0 0.0
      %1018 = vmatpush1.msra.mxu0 0.0
      %1019 = vmatprep.subr.mxu0 0.0
      %1020 = vmatpush1.msra.mxu0 0.0
      %1021 = vmatprep.subr.mxu0 0.0
      %1022 = vmatpush1.msra.mxu0 0.0
      %1023 = vmatprep.subr.mxu0 0.0
      %1024 = vmatpush1.msra.mxu0 0.0
      %1025 = vmatprep.subr.mxu0 0.0
      %1026 = vmatpush1.msra.mxu0 0.0
      %1027 = vmatprep.subr.mxu0 0.0
      %1028 = vmatpush1.msra.mxu0 0.0
      %1029 = vmatprep.subr.mxu0 0.0
      %1030 = vmatpush1.msra.mxu0 0.0
      %1031 = vmatprep.subr.mxu0 0.0
      %1032 = vmatpush1.msra.mxu0 0.0
      %1033 = vmatprep.subr.mxu0 0.0
      %1034 = vmatpush1.msra.mxu0 0.0
      %1035 = vmatprep.subr.mxu0 0.0
      %1036 = vmatpush1.msra.mxu0 %v1011
      %1037 = vmatprep.subr.mxu0 0.0
      %1038 = vmatpush1.msra.mxu0 %v982
      %1039 = vmatprep.subr.mxu0 0.0
      %1040 = vmatpush1.msra.mxu0 %v981
      %1041 = vmatprep.subr.mxu0 0.0
      %1042 = vmatpush1.msra.mxu0 %v980
      %1043 = vmatprep.subr.mxu0 0.0
      %1044 = vmatpush1.msra.mxu0 %v979
      %1045 = vmatprep.subr.mxu0 0.0
      %1046 = vmatpush2.msra.mxu0 0.0
      %1047 = vmatprep.subr.mxu0 0.0
      %1048 = vmatpush2.msra.mxu0 0.0
      %1049 = vmatprep.subr.mxu0 0.0
      %1050 = vmatpush2.msra.mxu0 0.0
      %1051 = vmatprep.subr.mxu0 0.0
      %1052 = vmatpush2.msra.mxu0 0.0
      %1053 = vmatprep.subr.mxu0 0.0
      %1054 = vmatpush2.msra.mxu0 0.0
      %1055 = vmatprep.subr.mxu0 0.0
      %1056 = vmatpush2.msra.mxu0 0.0
      %1057 = vmatprep.subr.mxu0 0.0
      %1058 = vmatpush2.msra.mxu0 0.0
      %1059 = vmatprep.subr.mxu0 0.0
      %1060 = vmatpush2.msra.mxu0 0.0
      %1061 = vmatprep.subr.mxu0 0.0
      %1062 = vmatpush2.msra.mxu0 0.0
      %1063 = vmatprep.subr.mxu0 0.0
      %1064 = vmatpush2.msra.mxu0 0.0
      %1065 = vmatprep.subr.mxu0 0.0
      %1066 = vmatpush2.msra.mxu0 0.0
      %1067 = vmatprep.subr.mxu0 0.0
      %1068 = vmatpush2.msra.mxu0 0.0
      %1069 = vmatprep.subr.mxu0 0.0
      %1070 = vmatpush2.msra.mxu0 0.0
      %1071 = vmatprep.subr.mxu0 0.0
      %1072 = vmatpush2.msra.mxu0 0.0
      %1073 = vmatprep.subr.mxu0 0.0
      %1074 = vmatpush2.msra.mxu0 0.0
      %1075 = vmatprep.subr.mxu0 0.0
      %1076 = vmatpush2.msra.mxu0 0.0
      %1077 = vmatprep.mubr.f32.mxu0 0.0
      %1078 = vmatmul.mubr.f32.gmra.mxu0 %v986
      %v1079 = vpop.f32.mrf.mxu0
      %v1080 = vadd.f32 0.0, %v1079
      %v1081 = vpop.f32.mrf.mxu0
      %1082 = vmatprep.mubr.f32.mxu0 0.0
      %1083 = vmatmul.mubr.f32.gmra.mxu0 %v989
      %v1084 = vpop.f32.mrf.mxu0
      %v1085 = vadd.f32 0.0, %v1084
      %v1086 = vpop.f32.mrf.mxu0
      %1087 = vmatprep.mubr.f32.mxu0 0.0
      %1088 = vmatmul.mubr.f32.gmra.mxu0 %v992
      %v1089 = vpop.f32.mrf.mxu0
      %v1090 = vadd.f32 0.0, %v1089
      %v1091 = vpop.f32.mrf.mxu0
      %1092 = vmatprep.mubr.f32.mxu0 0.0
      %1093 = vmatmul.mubr.f32.gmra.mxu0 %v995
      %v1094 = vpop.f32.mrf.mxu0
      %v1095 = vadd.f32 0.0, %v1094
      %v1096 = vpop.f32.mrf.mxu0
      %1097 = vmatprep.mubr.f32.mxu0 0.0
      %1098 = vmatmul.mubr.f32.gmra.mxu0 %v998
      %v1099 = vpop.f32.mrf.mxu0
      %v1100 = vadd.f32 0.0, %v1099
      %v1101 = vpop.f32.mrf.mxu0
      %1102 = vmatprep.mubr.f32.mxu0 0.0
      %1103 = vmatmul.mubr.f32.gmra.mxu0 %v1001
      %v1104 = vpop.f32.mrf.mxu0
      %v1105 = vadd.f32 0.0, %v1104
      %v1106 = vpop.f32.mrf.mxu0
      %1107 = vmatprep.mubr.f32.mxu0 0.0
      %1108 = vmatmul.mubr.f32.gmra.mxu0 %v1004
      %v1109 = vpop.f32.mrf.mxu0
      %v1110 = vadd.f32 0.0, %v1109
      %v1111 = vpop.f32.mrf.mxu0
      %1112 = vmatprep.mubr.f32.mxu0 0.0
      %1113 = vmatmul.mubr.f32.gmra.mxu0 %v1007
      %v1114 = vpop.f32.mrf.mxu0
      %v1115 = vadd.f32 0.0, %v1114
      %v1116 = vpop.f32.mrf.mxu0
      %1117 = vdwg.mxu0
      %1118 = vst.msk [vmem:[%s261] sm:$0xff] %vm916, %v1080
      %1119 = vst.msk [vmem:[%s261 + $0x8] sm:$0xff] %vm916, %v1085
      %1120 = vst.msk [vmem:[%s261 + $0x10] sm:$0xff] %vm916, %v1090
      %1121 = vst.msk [vmem:[%s261 + $0x18] sm:$0xff] %vm916, %v1095
      %1122 = vst.msk [vmem:[%s261 + $0x20] sm:$0xff] %vm916, %v1100
      %1123 = vst.msk [vmem:[%s261 + $0x28] sm:$0xff] %vm916, %v1105
      %1124 = vst.msk [vmem:[%s261 + $0x30] sm:$0xff] %vm916, %v1110
      %1125 = vst.msk [vmem:[%s261 + $0x38] sm:$0xff] %vm916, %v1115
      %v1126 = vsel %vm916, %v1080, 0.0
      %v1127 = vsel %vm916, %v1085, 0.0
      %v1128 = vadd.f32 %v1126, %v1127
      %v1129 = vsel %vm916, %v1090, 0.0
      %v1130 = vadd.f32 %v1128, %v1129
      %v1131 = vsel %vm916, %v1095, 0.0
      %v1132 = vadd.f32 %v1130, %v1131
      %v1133 = vsel %vm916, %v1100, 0.0
      %v1134 = vadd.f32 %v1132, %v1133
      %v1135 = vsel %vm916, %v1105, 0.0
      %v1136 = vadd.f32 %v1134, %v1135
      %v1137 = vsel %vm916, %v1110, 0.0
      %v1138 = vadd.f32 %v1136, %v1137
      %v1139 = vsel %vm916, %v1115, 0.0
      %v1140 = vadd.f32 %v1138, %v1139
      %v1141 = vrot.slane %v1140, 4
      %v1142 = vadd.f32 %v1140, %v1141
      %v1143 = vrot.slane %v1142, 2
      %v1144 = vadd.f32 %v1142, %v1143
      %v1145 = vrot.slane %v1144, 1
      %v1146 = vadd.f32 %v1144, %v1145
      %v1147 = vmul.f32 %v1080, %v1080
      %v1148 = vmul.f32 %v1085, %v1085
      %v1149 = vmul.f32 %v1090, %v1090
      %v1150 = vmul.f32 %v1095, %v1095
      %v1151 = vmul.f32 %v1100, %v1100
      %v1152 = vmul.f32 %v1105, %v1105
      %v1153 = vmul.f32 %v1110, %v1110
      %v1154 = vmul.f32 %v1115, %v1115
      %v1155 = vsel %vm916, %v1147, 0.0
      %v1156 = vsel %vm916, %v1148, 0.0
      %v1157 = vadd.f32 %v1155, %v1156
      %v1158 = vsel %vm916, %v1149, 0.0
      %v1159 = vadd.f32 %v1157, %v1158
      %v1160 = vsel %vm916, %v1150, 0.0
      %v1161 = vadd.f32 %v1159, %v1160
      %v1162 = vsel %vm916, %v1151, 0.0
      %v1163 = vadd.f32 %v1161, %v1162
      %v1164 = vsel %vm916, %v1152, 0.0
      %v1165 = vadd.f32 %v1163, %v1164
      %v1166 = vsel %vm916, %v1153, 0.0
      %v1167 = vadd.f32 %v1165, %v1166
      %v1168 = vsel %vm916, %v1154, 0.0
      %v1169 = vadd.f32 %v1167, %v1168
      %v1170 = vrot.slane %v1169, 4
      %v1171 = vadd.f32 %v1169, %v1170
      %v1172 = vrot.slane %v1171, 2
      %v1173 = vadd.f32 %v1171, %v1172
      %v1174 = vrot.slane %v1173, 1
      %v1175 = vadd.f32 %v1173, %v1174
      %vm1176 = vcmask 1040384
      %v1177 = vsel %vm1176, %v1146, %v1175
      %vm1178 = vcmask 58368
      %1179 = vst.msk [vmem:[%s270] sm:$0x3] %vm1178, %v1177
      %s1180 = smul.u32 4, %s22
      %p1181 = scmp.lt.s32.totalorder %s21, 1
      %s1182 = scalar_select %p1181, %s21, 1
      %p1183 = scmp.lt.s32.totalorder %s1180, 15
      %s1184 = scalar_select %p1183, %s1180, 15
      %s1185 = smul.addr %s1184, 2
      %s1186 = smul.addr %s1182, 32
      %s1187 = sadd.s32 %s1185, %s1186
      %s1188 = smul.addr %s1187, 8
      %s1189 = scalar_lea.vmem %s4, %s1188
      %p1190 = scmp.lt.s32.totalorder %s21, 1
      %s1191 = scalar_select %p1190, %s21, 1
      %p1192 = scmp.lt.s32.totalorder %s22, 3
      %s1193 = scalar_select %p1192, %s22, 3
      %s1194 = smul.addr %s1191, 4
      %s1195 = sadd.s32 %s1193, %s1194
      %s1196 = smul.addr %s1195, 2
      %s1197 = scalar_lea.vmem %s5, %s1196
      // Predicated region
      $region41: #{resblock_forward.4} parent=35 // pred_check
        %p1198 = pneg %p138
      $region42: #{resblock_forward.4} parent=35 // pred_check_branch
        %1200 = sbr.rel (%p1198) target = $region44
      $region43: #{resblock_forward.4} parent=35 // pred_region
        %s1201 = smul.u32 4, %s22
      $region44: #{resblock_forward.4} parent=35 // pred_fallthru
        _
      // Predicated region
      $region45: #{resblock_forward.4} parent=35 // pred_check
        %p1202 = pneg %p166
      $region46: #{resblock_forward.4} parent=35 // pred_check_branch
        %1204 = sbr.rel (%p1202) target = $region48
      $region47: #{resblock_forward.4} parent=35 // pred_region
        _
      $region48: #{resblock_forward.4} parent=35 // pred_fallthru
        _
    $region36: #{resblock_forward.4} parent=5 // pred_fallthru
      _
    %p1205 = scmp.le.s32.totalorder 2, %s12
    // Predicated region
    $region49: #{resblock_forward.4} parent=5 // pred_check
      %p1206 = pneg %p1205
    $region50: #{resblock_forward.4} parent=5 // pred_check_branch
      %1208 = sbr.rel (%p1206) target = $region52
    $region51: #{resblock_forward.4} parent=5 // pred_region
      %s1209 = ssub.s32 %s12, 2
      // Predicated region
      $region53: #{resblock_forward.4} parent=51 // pred_check
        %p1210 = pneg %p144
      $region54: #{resblock_forward.4} parent=51 // pred_check_branch
        %1212 = sbr.rel (%p1210) target = $region56
      $region55: #{resblock_forward.4} parent=51 // pred_region
        %s1213 = smul.u32 4, %s24
        %p1214 = scmp.lt.s32.totalorder %s23, 1
        %s1215 = scalar_select %p1214, %s23, 1
        %p1216 = scmp.lt.s32.totalorder %s1213, 15
        %s1217 = scalar_select %p1216, %s1213, 15
        %s1218 = smul.addr %s1217, 2
        %s1219 = smul.addr %s1215, 32
        %s1220 = sadd.s32 %s1218, %s1219
        %s1221 = smul.addr %s1220, 8
        %s1222 = scalar_lea.vmem %s4, %s1221
      $region56: #{resblock_forward.4} parent=51 // pred_fallthru
        _
      // Predicated region
      $region57: #{resblock_forward.4} parent=51 // pred_check
        %p1223 = pneg %p172
      $region58: #{resblock_forward.4} parent=51 // pred_check_branch
        %1225 = sbr.rel (%p1223) target = $region60
      $region59: #{resblock_forward.4} parent=51 // pred_region
        %p1226 = scmp.lt.s32.totalorder %s23, 1
        %s1227 = scalar_select %p1226, %s23, 1
        %p1228 = scmp.lt.s32.totalorder %s24, 3
        %s1229 = scalar_select %p1228, %s24, 3
        %s1230 = smul.addr %s1227, 4
        %s1231 = sadd.s32 %s1229, %s1230
        %s1232 = smul.addr %s1231, 2
        %s1233 = scalar_lea.vmem %s5, %s1232
      $region60: #{resblock_forward.4} parent=51 // pred_fallthru
        _
    $region52: #{resblock_forward.4} parent=5 // pred_fallthru
      _
  $region6: #{resblock_forward.4} parent=0 // loop_footer
    %s16 = sadd.s32 1, %s12
  $region7: #{resblock_forward.4} parent=0 // loop_footer_branch
    %11 = sbr.rel target = $region3
  $region8: #{resblock_forward.4} parent=0 // loop_exit
    _

// kernel: resblock_forward.5
$region0: #{resblock_forward.5}
  #allocation0 [shape = 'u32[]', space=smem, size = 0x4, offset = 0x4, fixed_abs, tag = 'smem constant byte address 0x4 - core index']
  #allocation1 [shape = 'u32[144,128]{1,0:T(1,128)}', space=vmem, size = 0x12000, scoped, tag = 'internal scratch']
  %s0 = inlined_call_operand.vmem [shape: f32[32,128], index: 0, kind: input, shape index: {}]
  %s1 = inlined_call_operand.vmem [shape: f32[32,128], index: 1, kind: input, shape index: {}]
  %s2 = inlined_call_operand.vmem [shape: f32[1,128], index: 2, kind: input, shape index: {}]
  %s3 = inlined_call_operand.vmem [shape: f32[1,128], index: 3, kind: input, shape index: {}]
  %s4 = inlined_call_operand.vmem [shape: f32[32,128], index: 4, kind: output, shape index: {}]
  %s5 = sld [smem:[#allocation0]]
  $region49: #{resblock_forward.5} parent=0
    _
  %s7 = ssub.s32 1, %s5
  %s8 = scalar_select 0, %s7, %s5
  loop: start=0, step=1, limit=4
  $region2: #{resblock_forward.5} parent=0 // loop_pre_header
    _
  $region3: #{resblock_forward.5} parent=0 // loop_header
    %s10 = sphi 0, %s14
    %p11 = scmp.ge.s32.totalorder %s10, 4
    %s20 = sphi 0, %s22
    %s23 = sphi 0, %s20
    %s24 = sphi 0, %s23
    %s40 = sphi 0, %s24
    %s46 = sphi 0, %s48
    %s49 = sphi 0, %s46
    %s50 = sphi 0, %s49
    %s66 = sphi 0, %s50
    %s70 = sphi 0, %s70
    %s72 = sphi 0, %s70
    %s73 = sphi 0, %s72
    %s87 = sphi 0, %s73
    %s91 = sphi 0, %s91
    %s93 = sphi 0, %s91
    %s94 = sphi 0, %s93
    %s108 = sphi 0, %s94
    %s114 = sphi 0, %s116
    %s117 = sphi 0, %s114
    %s118 = sphi 0, %s117
    %s134 = sphi 0, %s118
  $region4: #{resblock_forward.5} parent=0 // loop_header_branch
    %13 = sbr.rel (%p11) target = $region8
  $region5: #{resblock_forward.5} parent=0 // loop_body
    %s15 = ssub.s32 %s10, 1
    %s16 = ssub.s32 %s10, 2
    %s17 = sadd.s32 %s10, 1
    %s18 = ssub.s32 %s10, %s17
    %p19 = scmp.eq.s32.totalorder %s18, 0
    %s21 = sadd.s32 %s20, 1
    %s22 = scalar_select %p19, %s20, %s21
    %p25 = pneg %p19
    %p26 = scmp.eq.s32.totalorder %s10, 1
    %p27 = por %p25, %p26
    %p28 = scmp.ne.s32.totalorder %s20, %s23
    %p29 = scmp.eq.s32.totalorder %s10, 0
    %p30 = por %p28, %p29
    %p31 = scmp.ne.s32.totalorder %s20, %s23
    %p32 = scmp.eq.s32.totalorder %s15, 1
    %p33 = por %p31, %p32
    %p34 = scmp.ne.s32.totalorder %s23, %s24
    %p35 = scmp.eq.s32.totalorder %s15, 0
    %p36 = por %p34, %p35
    %p37 = scmp.ne.s32.totalorder %s23, %s24
    %p38 = scmp.eq.s32.totalorder %s16, 1
    %p39 = por %p37, %p38
    %p41 = scmp.ne.s32.totalorder %s24, %s40
    %p42 = scmp.eq.s32.totalorder %s16, 0
    %p43 = por %p41, %p42
    %s44 = ssub.s32 %s10, %s17
    %p45 = scmp.eq.s32.totalorder %s44, 0
    %s47 = sadd.s32 %s46, 1
    %s48 = scalar_select %p45, %s46, %s47
    %p51 = pneg %p45
    %p52 = scmp.eq.s32.totalorder %s10, 1
    %p53 = por %p51, %p52
    %p54 = scmp.ne.s32.totalorder %s46, %s49
    %p55 = scmp.eq.s32.totalorder %s10, 0
    %p56 = por %p54, %p55
    %p57 = scmp.ne.s32.totalorder %s46, %s49
    %p58 = scmp.eq.s32.totalorder %s15, 1
    %p59 = por %p57, %p58
    %p60 = scmp.ne.s32.totalorder %s49, %s50
    %p61 = scmp.eq.s32.totalorder %s15, 0
    %p62 = por %p60, %p61
    %p63 = scmp.ne.s32.totalorder %s49, %s50
    %p64 = scmp.eq.s32.totalorder %s16, 1
    %p65 = por %p63, %p64
    %p67 = scmp.ne.s32.totalorder %s50, %s66
    %p68 = scmp.eq.s32.totalorder %s16, 0
    %p69 = por %p67, %p68
    %s71 = sadd.s32 %s70, 1
    %p74 = scmp.eq.s32.totalorder %s10, 1
    %p75 = scmp.ne.s32.totalorder %s70, %s72
    %p76 = scmp.eq.s32.totalorder %s10, 0
    %p77 = por %p75, %p76
    %p78 = scmp.ne.s32.totalorder %s70, %s72
    %p79 = scmp.eq.s32.totalorder %s15, 1
    %p80 = por %p78, %p79
    %p81 = scmp.ne.s32.totalorder %s72, %s73
    %p82 = scmp.eq.s32.totalorder %s15, 0
    %p83 = por %p81, %p82
    %p84 = scmp.ne.s32.totalorder %s72, %s73
    %p85 = scmp.eq.s32.totalorder %s16, 1
    %p86 = por %p84, %p85
    %p88 = scmp.ne.s32.totalorder %s73, %s87
    %p89 = scmp.eq.s32.totalorder %s16, 0
    %p90 = por %p88, %p89
    %s92 = sadd.s32 %s91, 1
    %p95 = scmp.eq.s32.totalorder %s10, 1
    %p96 = scmp.ne.s32.totalorder %s91, %s93
    %p97 = scmp.eq.s32.totalorder %s10, 0
    %p98 = por %p96, %p97
    %p99 = scmp.ne.s32.totalorder %s91, %s93
    %p100 = scmp.eq.s32.totalorder %s15, 1
    %p101 = por %p99, %p100
    %p102 = scmp.ne.s32.totalorder %s93, %s94
    %p103 = scmp.eq.s32.totalorder %s15, 0
    %p104 = por %p102, %p103
    %p105 = scmp.ne.s32.totalorder %s93, %s94
    %p106 = scmp.eq.s32.totalorder %s16, 1
    %p107 = por %p105, %p106
    %p109 = scmp.ne.s32.totalorder %s94, %s108
    %p110 = scmp.eq.s32.totalorder %s16, 0
    %p111 = por %p109, %p110
    %s112 = ssub.s32 %s10, %s17
    %p113 = scmp.eq.s32.totalorder %s112, 0
    %s115 = sadd.s32 %s114, 1
    %s116 = scalar_select %p113, %s114, %s115
    %p119 = pneg %p113
    %p120 = scmp.eq.s32.totalorder %s10, 1
    %p121 = por %p119, %p120
    %p122 = scmp.ne.s32.totalorder %s114, %s117
    %p123 = scmp.eq.s32.totalorder %s10, 0
    %p124 = por %p122, %p123
    %p125 = scmp.ne.s32.totalorder %s114, %s117
    %p126 = scmp.eq.s32.totalorder %s15, 1
    %p127 = por %p125, %p126
    %p128 = scmp.ne.s32.totalorder %s117, %s118
    %p129 = scmp.eq.s32.totalorder %s15, 0
    %p130 = por %p128, %p129
    %p131 = scmp.ne.s32.totalorder %s117, %s118
    %p132 = scmp.eq.s32.totalorder %s16, 1
    %p133 = por %p131, %p132
    %p135 = scmp.ne.s32.totalorder %s118, %s134
    %p136 = scmp.eq.s32.totalorder %s16, 0
    %p137 = por %p135, %p136
    %p138 = scmp.le.s32.totalorder 1, %s10
    %p139 = scmp.lt.s32.totalorder %s10, 3
    %p140 = pnand %p138, %p139
    %p141 = pneg %p140
    // Predicated region
    $region9: #{resblock_forward.5} parent=5 // pred_check
      _
    $region10: #{resblock_forward.5} parent=5 // pred_check_branch
      %143 = sbr.rel (%p140) target = $region12
    $region11: #{resblock_forward.5} parent=5 // pred_region
      %s144 = ssub.s32 %s10, 1
      // Predicated region
      $region13: #{resblock_forward.5} parent=11 // pred_check
        %p145 = pneg %p83
      $region14: #{resblock_forward.5} parent=11 // pred_check_branch
        %147 = sbr.rel (%p145) target = $region16
      $region15: #{resblock_forward.5} parent=11 // pred_region
        _
      $region16: #{resblock_forward.5} parent=11 // pred_fallthru
        _
      // Predicated region
      $region17: #{resblock_forward.5} parent=11 // pred_check
        %p148 = pneg %p104
      $region18: #{resblock_forward.5} parent=11 // pred_check_branch
        %150 = sbr.rel (%p148) target = $region20
      $region19: #{resblock_forward.5} parent=11 // pred_region
        _
      $region20: #{resblock_forward.5} parent=11 // pred_fallthru
        _
    $region12: #{resblock_forward.5} parent=5 // pred_fallthru
      _
    %p151 = scmp.lt.s32.totalorder %s10, 2
    // Predicated region
    $region21: #{resblock_forward.5} parent=5 // pred_check
      %p152 = pneg %p151
    $region22: #{resblock_forward.5} parent=5 // pred_check_branch
      %154 = sbr.rel (%p152) target = $region24
    $region23: #{resblock_forward.5} parent=5 // pred_region
      // Predicated region
      $region25: #{resblock_forward.5} parent=23 // pred_check
        %p155 = pneg %p30
      $region26: #{resblock_forward.5} parent=23 // pred_check_branch
        %157 = sbr.rel (%p155) target = $region28
      $region27: #{resblock_forward.5} parent=23 // pred_region
        %s158 = smul.u32 2, %s10
        %p159 = scmp.lt.s32.totalorder %s158, 3
        %s160 = scalar_select %p159, %s158, 3
        %s161 = smul.addr %s160, 8
        %s162 = scalar_lea.vmem %s0, %s161
        %s163 = smul.u32 2, %s10
      $region28: #{resblock_forward.5} parent=23 // pred_fallthru
        _
      // Predicated region
      $region29: #{resblock_forward.5} parent=23 // pred_check
        %p164 = pneg %p56
      $region30: #{resblock_forward.5} parent=23 // pred_check_branch
        %166 = sbr.rel (%p164) target = $region32
      $region31: #{resblock_forward.5} parent=23 // pred_region
        %s167 = smul.u32 2, %s10
        %p168 = scmp.lt.s32.totalorder %s167, 3
        %s169 = scalar_select %p168, %s167, 3
        %s170 = smul.addr %s169, 8
        %s171 = scalar_lea.vmem %s1, %s170
        %s172 = smul.u32 2, %s10
      $region32: #{resblock_forward.5} parent=23 // pred_fallthru
        _
    $region24: #{resblock_forward.5} parent=5 // pred_fallthru
      _
    %p173 = scmp.le.s32.totalorder 1, %s10
    %p174 = scmp.lt.s32.totalorder %s10, 3
    %p175 = pnand %p173, %p174
    %p176 = pneg %p175
    // Predicated region
    $region33: #{resblock_forward.5} parent=5 // pred_check
      _
    $region34: #{resblock_forward.5} parent=5 // pred_check_branch
      %178 = sbr.rel (%p175) target = $region36
    $region35: #{resblock_forward.5} parent=5 // pred_region
      %s179 = ssub.s32 %s10, 1
      %s180 = smul.u32 2, %s15
      %p181 = scmp.lt.s32.totalorder %s180, 3
      %s182 = scalar_select %p181, %s180, 3
      %s183 = smul.addr %s182, 8
      %s184 = scalar_lea.vmem %s0, %s183
      %p185 = pneg %p36
      %p186 = pneg %p33
      %s187 = smul.u32 2, %s15
      %p188 = scmp.lt.s32.totalorder %s187, 3
      %s189 = scalar_select %p188, %s187, 3
      %s190 = smul.addr %s189, 8
      %s191 = scalar_lea.vmem %s1, %s190
      %p192 = pneg %p62
      %p193 = pneg %p59
      %p194 = pneg %p83
      %p195 = pneg %p80
      %p196 = pneg %p104
      %p197 = pneg %p101
      %p198 = pneg %p130
      %p199 = pneg %p127
      %s200 = smul.u32 2, %s15
      %p201 = scmp.lt.s32.totalorder %s200, 3
      %s202 = scalar_select %p201, %s200, 3
      %s203 = smul.addr %s202, 8
      %s204 = scalar_lea.vmem %s4, %s203
      %s205 = smul.u32 2, %s15
      %p206 = scmp.lt.s32.totalorder %s205, 3
      %s207 = scalar_select %p206, %s205, 3
      %s208 = smul.addr %s207, 8
      %s209 = scalar_lea.vmem %s0, %s208
      %s210 = smul.u32 2, %s15
      %s211 = smul.u32 2, %s15
      %p212 = scmp.lt.s32.totalorder %s211, 3
      %s213 = scalar_select %p212, %s211, 3
      %s214 = smul.addr %s213, 8
      %s215 = scalar_lea.vmem %s1, %s214
      %s216 = smul.u32 2, %s15
      %s217 = smul.u32 2, %s15
      %p218 = scmp.lt.s32.totalorder %s217, 3
      %s219 = scalar_select %p218, %s217, 3
      %s220 = smul.addr %s219, 8
      %s221 = scalar_lea.vmem %s4, %s220
      %s222 = smul.u32 2, %s15
      %v223 = vld [vmem:[%s209] sm:$0xff]
      %v224 = vld [vmem:[%s209 + $0x8] sm:$0xff]
      %v225 = vld [vmem:[%s2] sm:$0x1]
      %v227 = vlaneseq
      %v228 = vshrl.u32 %v227, 7
      %v229 = vsub.s32 0, %v228
      %v230 = vrot.slane %v225, %v229
      %v232 = vmul.f32 %v223, %v230
      %v233 = vmul.f32 %v224, %v230
      %v234 = vld [vmem:[%s3] sm:$0x1]
      %v236 = vlaneseq
      %v237 = vshrl.u32 %v236, 7
      %v238 = vsub.s32 0, %v237
      %v239 = vrot.slane %v234, %v238
      %v241 = vadd.f32 %v232, %v239
      %v242 = vadd.f32 %v233, %v239
      %vm243 = vcmp.gt.f32.partialorder %v241, 0.0
      %vm244 = vcmp.gt.f32.partialorder %v242, 0.0
      %v245 = vmul.f32 %v241, 0.1
      %v246 = vmul.f32 %v242, 0.1
      %v247 = vsel %vm243, %v241, %v245
      %v248 = vsel %vm244, %v242, %v246
      %v249 = vld [vmem:[%s215] sm:$0xff]
      %v250 = vld [vmem:[%s215 + $0x8] sm:$0xff]
      %v251 = vadd.f32 %v247, %v249
      %v252 = vadd.f32 %v248, %v250
      %253 = vst [vmem:[%s221] sm:$0xff] %v251
      %254 = vst [vmem:[%s221 + $0x8] sm:$0xff] %v252
      %s255 = smul.u32 2, %s15
      %p256 = scmp.lt.s32.totalorder %s255, 3
      %s257 = scalar_select %p256, %s255, 3
      %s258 = smul.addr %s257, 8
      %s259 = scalar_lea.vmem %s4, %s258
      // Predicated region
      $region37: #{resblock_forward.5} parent=35 // pred_check
        %p260 = pneg %p127
      $region38: #{resblock_forward.5} parent=35 // pred_check_branch
        %262 = sbr.rel (%p260) target = $region40
      $region39: #{resblock_forward.5} parent=35 // pred_region
        %s263 = smul.u32 2, %s15
      $region40: #{resblock_forward.5} parent=35 // pred_fallthru
        _
    $region36: #{resblock_forward.5} parent=5 // pred_fallthru
      _
    %p264 = scmp.le.s32.totalorder 2, %s10
    // Predicated region
    $region41: #{resblock_forward.5} parent=5 // pred_check
      %p265 = pneg %p264
    $region42: #{resblock_forward.5} parent=5 // pred_check_branch
      %267 = sbr.rel (%p265) target = $region44
    $region43: #{resblock_forward.5} parent=5 // pred_region
      %s268 = ssub.s32 %s10, 2
      // Predicated region
      $region45: #{resblock_forward.5} parent=43 // pred_check
        %p269 = pneg %p133
      $region46: #{resblock_forward.5} parent=43 // pred_check_branch
        %271 = sbr.rel (%p269) target = $region48
      $region47: #{resblock_forward.5} parent=43 // pred_region
        %s272 = smul.u32 2, %s16
        %p273 = scmp.lt.s32.totalorder %s272, 3
        %s274 = scalar_select %p273, %s272, 3
        %s275 = smul.addr %s274, 8
        %s276 = scalar_lea.vmem %s4, %s275
      $region48: #{resblock_forward.5} parent=43 // pred_fallthru
        _
    $region44: #{resblock_forward.5} parent=5 // pred_fallthru
      _
  $region6: #{resblock_forward.5} parent=0 // loop_footer
    %s14 = sadd.s32 1, %s10
  $region7: #{resblock_forward.5} parent=0 // loop_footer_branch
    %9 = sbr.rel target = $region3
  $region8: #{resblock_forward.5} parent=0 // loop_exit
    _

</llo_original>
